<compile_context>
chip_gen: v7x
topology: tpu7x:2x2x1
jax: 0.10.0
libtpu: 0.0.40
codegen_flags: <defaults>
</compile_context>

<pallas_src>
import functools

import jax
import jax.numpy as jnp
from jax.experimental import pallas as pl
from jax.experimental.pallas import tpu as pltpu


_VMEM = pl.BlockSpec(memory_space=pltpu.MemorySpace.VMEM)


# ------------------------------ Pallas kernel ------------------------------ #

def _double_conv_kernel(x_ref, t1_ref, g1_ref, b1_ref, t2_ref, g2_ref, b2_ref,
                        o_ref, *, h, w, eps, inv_count):
    """Fused Conv3x3+BN+ReLU -> Conv3x3+BN+ReLU on a lane-dense (N*H, W*C) slab.

    x_ref:  (N*H, W*Cin_p)        f32 input rows (channel-padded, lane-dense)
    tK_ref: (3*W*Cin_k, W*Cout_k) bf16 kh-stacked Toeplitz-folded conv weights
    gK_ref, bK_ref: (1, W*Cout_k) f32 BN gamma/beta pre-tiled over W
    o_ref:  (N*H, W*Cout)         f32 output slab (lane-dense store)
    """
    rows = x_ref.shape[0]
    # Per-sample row index, for zeroing the SAME-padding taps at H boundaries
    # (pltpu.roll wraps; the wrapped/bled rows are exactly the masked ones).
    row_in_img = jax.lax.broadcasted_iota(jnp.int32, (rows, 1), 0) % h

    def group_sum_bcast(v, c):
        # v: (1, W*C) laid out [w-major, c-minor].  Per-channel sum over the W
        # positions, broadcast back to (1, W*C).  Lane-offset slice adds + one
        # lane concat: no MXU projection, no cross-lane relayout.
        tot = v[:, 0:c]
        for p in range(1, w):
            tot = tot + v[:, p * c:(p + 1) * c]
        return jnp.concatenate([tot] * w, axis=-1)

    def conv3x3_bn_relu(x2d, t_ref, g_ref, b_ref, c_out):
        # kh taps as row-shifted copies (XLU roll), zeroed at image boundaries.
        up = jnp.where(row_in_img == 0, 0.0,
                       pltpu.roll(x2d, shift=1, axis=0))          # row y-1
        down = jnp.where(row_in_img == h - 1, 0.0,
                         pltpu.roll(x2d, shift=rows - 1, axis=0))  # row y+1

        # Single K-concatenated MXU matmul:
        #   (N*H, 3*W*Cin) bf16  x  (3*W*Cin, W*Cout) bf16  ->  f32
        lhs = jnp.concatenate([up, x2d, down], axis=-1).astype(jnp.bfloat16)
        acc = jnp.dot(lhs, t_ref[...], preferred_element_type=jnp.float32)

        # Training-mode BatchNorm (batch statistics, biased variance), 2-pass.
        col_s = jnp.sum(acc, axis=0, keepdims=True)                # (1, W*C)
        mean = group_sum_bcast(col_s, c_out) * inv_count
        centered = acc - mean
        col_q = jnp.sum(centered * centered, axis=0, keepdims=True)
        var = group_sum_bcast(col_q, c_out) * inv_count
        scale = jax.lax.rsqrt(var + eps) * g_ref[...]
        return jnp.maximum(centered * scale + b_ref[...], 0.0)     # (N*H, W*C)

    c_mid = g1_ref.shape[-1] // w
    c_out = g2_ref.shape[-1] // w
    y1 = conv3x3_bn_relu(x_ref[...], t1_ref, g1_ref, b1_ref, c_mid)
    y2 = conv3x3_bn_relu(y1, t2_ref, g2_ref, b2_ref, c_out)
    o_ref[...] = y2


# ------------------------------ JAX wrapper -------------------------------- #

def _toeplitz_conv_weights(w_hwio, width):
    """Fold kw taps + W zero-padding of a 3x3 SAME conv and stack the kh taps
    along K, producing ONE bf16 matrix of shape (3*W*Cin, W*Cout):
        T[kh*W*Cin + (x+dx-1)*Cin + c, x*Cout + o] = w_hwio[kh, dx, c, o]
    (taps with x+dx-1 outside [0, W) are zero == SAME padding along W)."""
    kh, kw, cin, cout = w_hwio.shape
    shift = jnp.stack([jnp.eye(width, width, k=1 - dx, dtype=w_hwio.dtype)
                       for dx in range(kw)])                    # (3, W, W)
    t = jnp.einsum('dpx,ydco->ypcxo', shift, w_hwio)            # (3, W, Cin, W, Cout)
    return t.reshape(kh * width * cin, width * cout).astype(jnp.bfloat16)


def _padded_channels(c, width):
    """Smallest c' >= c such that width*c' fills full 128-lane vregs."""
    if (width * c) % 128 == 0:
        return c
    if 128 % width == 0:
        per_lane = 128 // width
        return ((c + per_lane - 1) // per_lane) * per_lane
    return c


def prepare_double_conv_constants(params, width):
    """One-time (per parameter update) folding of kernel-side constants.
    Hoisted out of the jitted forward so it is not rebuilt every call."""
    cin = params["w1"].shape[2]
    cmid = params["w1"].shape[-1]
    cout = params["w2"].shape[-1]
    cin_p = _padded_channels(cin, width)
    w1 = params["w1"]
    if cin_p != cin:
        w1 = jnp.pad(w1, ((0, 0), (0, 0), (0, cin_p - cin), (0, 0)))
    # NOTE: conv biases b1/b2 are intentionally NOT folded -- a per-channel
    # bias followed by training-mode BatchNorm cancels exactly.
    return {
        "t1": _toeplitz_conv_weights(w1, width),            # (3*W*Cin_p, W*Cmid)
        "t2": _toeplitz_conv_weights(params["w2"], width),  # (3*W*Cmid, W*Cout)
        "g1": jnp.tile(params["g1"].astype(jnp.float32), width).reshape(1, width * cmid),
        "be1": jnp.tile(params["be1"].astype(jnp.float32), width).reshape(1, width * cmid),
        "g2": jnp.tile(params["g2"].astype(jnp.float32), width).reshape(1, width * cout),
        "be2": jnp.tile(params["be2"].astype(jnp.float32), width).reshape(1, width * cout),
    }


def init_double_conv_params(key, in_channels, out_channels, mid_channels=None,
                            dtype=jnp.float32):
    if not mid_channels:
        mid_channels = out_channels
    k1, k2, k3, k4 = jax.random.split(key, 4)
    return {
        # conv weights stored HWIO (kh, kw, cin, cout)
        "w1": jax.random.normal(k1, (3, 3, in_channels, mid_channels), dtype) * 0.1,
        "b1": jax.random.normal(k2, (mid_channels,), dtype) * 0.1,
        "g1": jnp.ones((mid_channels,), dtype),
        "be1": jnp.zeros((mid_channels,), dtype),
        "w2": jax.random.normal(k3, (3, 3, mid_channels, out_channels), dtype) * 0.1,
        "b2": jax.random.normal(k4, (out_channels,), dtype) * 0.1,
        "g2": jnp.ones((out_channels,), dtype),
        "be2": jnp.zeros((out_channels,), dtype),
    }


@functools.partial(jax.jit, static_argnames=("eps",))
def double_conv_forward(x_nchw, consts, eps=1e-5):
    """DoubleConv.forward. Input/output are PyTorch-style NCHW."""
    n, cin, h, w = x_nchw.shape
    cin_p = consts["t1"].shape[0] // (3 * w)
    cout = consts["g2"].shape[-1] // w

    # NCHW -> lane-dense (N*H, W*Cin_p) rows (channel zero-pad to full lanes).
    # TODO(synk): when chaining DoubleConv blocks, keep activations lane-dense
    # (NHWC) across layers instead of paying this transpose at every boundary.
    x_nhwc = jnp.transpose(x_nchw, (0, 2, 3, 1))
    if cin_p != cin:
        x_nhwc = jnp.pad(x_nhwc, ((0, 0), (0, 0), (0, 0), (0, cin_p - cin)))
    x_rows = x_nhwc.reshape(n * h, w * cin_p)

    kern = functools.partial(_double_conv_kernel, h=h, w=w, eps=eps,
                             inv_count=1.0 / float(n * h * w))

    # Single-block (grid-less) launch: all operands are < 0.2 MiB, far under
    # the VMEM budget of v5e/v6e (128 MiB) and v7x (64 MiB per TC).
    # TODO(synk): for UNet-scale activations (and to use v7x's second
    # TensorCore) grid-tile over N*H row blocks marked "parallel" with a
    # two-phase cross-tile BN reduction, and switch to channel-folded im2col
    # once Cin >= ~32 (W-folded Toeplitz weights grow quadratically with W).
    out2d = pl.pallas_call(
        kern,
        out_shape=jax.ShapeDtypeStruct((n * h, w * cout), jnp.float32),
        in_specs=[_VMEM] * 7,
        out_specs=_VMEM,
    )(x_rows, consts["t1"], consts["g1"], consts["be1"],
      consts["t2"], consts["g2"], consts["be2"])

    # (N*H, W*Cout) -> NCHW
    return out2d.reshape(n, h, w, cout).transpose(0, 3, 1, 2)


# --------------------------- pure-JAX reference ----------------------------- #

def _ref_double_conv(x_nchw, params, eps=1e-5):
    def conv_bn_relu(x, wgt, b, g, be):
        y = jax.lax.conv_general_dilated(
            x, wgt, window_strides=(1, 1), padding="SAME",
            dimension_numbers=("NCHW", "HWIO", "NCHW"))
        y = y + b[None, :, None, None]     # conv bias (cancels through train-BN)
        mean = y.mean(axis=(0, 2, 3), keepdims=True)
        var = ((y - mean) ** 2).mean(axis=(0, 2, 3), keepdims=True)
        y = (y - mean) * jax.lax.rsqrt(var + eps) * g[None, :, None, None] \
            + be[None, :, None, None]
        return jnp.maximum(y, 0.0)

    x = conv_bn_relu(x_nchw, params["w1"], params["b1"], params["g1"], params["be1"])
    x = conv_bn_relu(x, params["w2"], params["b2"], params["g2"], params["be2"])
    return x


# ----------------------------------- main ----------------------------------- #

if __name__ == "__main__":
    in_channels, out_channels = 4, 8
    N, H, W = 2, 16, 16

    key = jax.random.PRNGKey(0)
    kx, kp = jax.random.split(key)
    x = jax.random.normal(kx, (N, in_channels, H, W), jnp.float32)
    params = init_double_conv_params(kp, in_channels, out_channels)
    consts = prepare_double_conv_constants(params, W)   # hoisted, built once

    out = jax.block_until_ready(double_conv_forward(x, consts))
    assert out.shape == (N, out_channels, H, W), out.shape

    # bf16 MXU operands vs f32 reference -> relaxed tolerance (documented).
    ref = _ref_double_conv(x, params)
    if not jnp.allclose(out, ref, atol=5e-2, rtol=5e-2):
        err = jnp.max(jnp.abs(out - ref))
        raise AssertionError(
            f"Pallas DoubleConv kernel mismatch vs JAX reference (max abs err {err})")

    print("KERNEL_OK")
</pallas_src>

<mosaic_0001>
module attributes {stable_mosaic.version = 11 : i64} {
  func.func @_double_conv_kernel(%arg0: memref<32x128xf32, #tpu.memory_space<vmem>>, %arg1: memref<384x128xbf16, #tpu.memory_space<vmem>>, %arg2: memref<1x128xf32, #tpu.memory_space<vmem>>, %arg3: memref<1x128xf32, #tpu.memory_space<vmem>>, %arg4: memref<384x128xbf16, #tpu.memory_space<vmem>>, %arg5: memref<1x128xf32, #tpu.memory_space<vmem>>, %arg6: memref<1x128xf32, #tpu.memory_space<vmem>>, %arg7: memref<32x128xf32, #tpu.memory_space<vmem>>) attributes {dimension_semantics = [], scalar_prefetch = 0 : i64, scratch_operands = 0 : i64, tpu.core_type = #tpu.core_type<tc>} {
    %0 = tpu.iota {dimensions = array<i32: 0>} : vector<32x1xi32>
    %c16_i32 = arith.constant 16 : i32
    %c0_i32 = arith.constant 0 : i32
    %1 = arith.cmpi eq, %c16_i32, %c0_i32 : i32
    %c1_i32 = arith.constant 1 : i32
    %2 = arith.select %1, %c1_i32, %c16_i32 : i32
    %3 = vector.broadcast %2 : i32 to vector<32x1xi32>
    %4 = arith.remsi %0, %3 : vector<32x1xi32>
    %c0_i32_0 = arith.constant 0 : i32
    %5 = vector.broadcast %c0_i32_0 : i32 to vector<32x1xi32>
    %6 = arith.cmpi ne, %4, %5 : vector<32x1xi32>
    %c0_i32_1 = arith.constant 0 : i32
    %7 = vector.broadcast %c0_i32_1 : i32 to vector<32x1xi32>
    %8 = arith.cmpi slt, %4, %7 : vector<32x1xi32>
    %c0_i32_2 = arith.constant 0 : i32
    %9 = arith.cmpi slt, %2, %c0_i32_2 : i32
    %10 = vector.broadcast %9 : i1 to vector<32x1xi1>
    %11 = vector.broadcast %10 : vector<32x1xi1> to vector<32x1xi1>
    %12 = arith.xori %8, %11 : vector<32x1xi1>
    %13 = arith.andi %12, %6 : vector<32x1xi1>
    %14 = vector.broadcast %2 : i32 to vector<32x1xi32>
    %15 = arith.addi %4, %14 : vector<32x1xi32>
    %16 = arith.select %13, %15, %4 : vector<32x1xi1>, vector<32x1xi32>
    %c0 = arith.constant 0 : index
    %c0_3 = arith.constant 0 : index
    %17 = vector.load %arg0[%c0, %c0_3] : memref<32x128xf32, #tpu.memory_space<vmem>>, vector<32x128xf32>
    %c0_i32_4 = arith.constant 0 : i32
    %18 = vector.broadcast %c0_i32_4 : i32 to vector<32x1xi32>
    %19 = arith.cmpi eq, %16, %18 : vector<32x1xi32>
    %c1_i32_5 = arith.constant 1 : i32
    %20 = tpu.dynamic_rotate %17 by %c1_i32_5 dim 0 : vector<32x128xf32>, i32 -> vector<32x128xf32>
    %cst = arith.constant 0.000000e+00 : f32
    %21 = vector.shape_cast %19 : vector<32x1xi1> to vector<32x1xi1>
    %22 = vector.broadcast %21 : vector<32x1xi1> to vector<32x128xi1>
    %23 = vector.broadcast %cst : f32 to vector<32x128xf32>
    %24 = arith.select %22, %23, %20 : vector<32x128xi1>, vector<32x128xf32>
    %c15_i32 = arith.constant 15 : i32
    %25 = vector.broadcast %c15_i32 : i32 to vector<32x1xi32>
    %26 = arith.cmpi eq, %16, %25 : vector<32x1xi32>
    %c31_i32 = arith.constant 31 : i32
    %27 = tpu.dynamic_rotate %17 by %c31_i32 dim 0 : vector<32x128xf32>, i32 -> vector<32x128xf32>
    %cst_6 = arith.constant 0.000000e+00 : f32
    %28 = vector.shape_cast %26 : vector<32x1xi1> to vector<32x1xi1>
    %29 = vector.broadcast %28 : vector<32x1xi1> to vector<32x128xi1>
    %30 = vector.broadcast %cst_6 : f32 to vector<32x128xf32>
    %31 = arith.select %29, %30, %27 : vector<32x128xi1>, vector<32x128xf32>
    %32 = tpu.concatenate %24, %17, %31 in 1 : vector<32x128xf32>, vector<32x128xf32>, vector<32x128xf32> -> vector<32x384xf32>
    %33 = arith.truncf %32 : vector<32x384xf32> to vector<32x384xbf16>
    %c0_7 = arith.constant 0 : index
    %c0_8 = arith.constant 0 : index
    %34 = vector.load %arg1[%c0_7, %c0_8] : memref<384x128xbf16, #tpu.memory_space<vmem>>, vector<384x128xbf16>
    %cst_9 = arith.constant dense<0.000000e+00> : vector<32x128xf32>
    %35 = tpu.matmul %33, %34, %cst_9 {dimension_numbers = #tpu.dot_dimension_numbers<[1], [0], [0], [1], [0, 0, 1, 1], [], []>} : vector<32x384xbf16>, vector<384x128xbf16>, vector<32x128xf32> -> vector<32x128xf32>
    %cst_10 = arith.constant dense<0.000000e+00> : vector<128xf32>
    %36 = vector.multi_reduction <add>, %35, %cst_10 [0] : vector<32x128xf32> to vector<128xf32>
    %37 = vector.shape_cast %36 : vector<128xf32> to vector<1x128xf32>
    %38 = vector.extract_strided_slice %37 {offsets = [0, 0], sizes = [1, 8], strides = [1, 1]} : vector<1x128xf32> to vector<1x8xf32>
    %39 = vector.extract_strided_slice %37 {offsets = [0, 8], sizes = [1, 8], strides = [1, 1]} : vector<1x128xf32> to vector<1x8xf32>
    %40 = arith.addf %38, %39 : vector<1x8xf32>
    %41 = vector.extract_strided_slice %37 {offsets = [0, 16], sizes = [1, 8], strides = [1, 1]} : vector<1x128xf32> to vector<1x8xf32>
    %42 = arith.addf %40, %41 : vector<1x8xf32>
    %43 = vector.extract_strided_slice %37 {offsets = [0, 24], sizes = [1, 8], strides = [1, 1]} : vector<1x128xf32> to vector<1x8xf32>
    %44 = arith.addf %42, %43 : vector<1x8xf32>
    %45 = vector.extract_strided_slice %37 {offsets = [0, 32], sizes = [1, 8], strides = [1, 1]} : vector<1x128xf32> to vector<1x8xf32>
    %46 = arith.addf %44, %45 : vector<1x8xf32>
    %47 = vector.extract_strided_slice %37 {offsets = [0, 40], sizes = [1, 8], strides = [1, 1]} : vector<1x128xf32> to vector<1x8xf32>
    %48 = arith.addf %46, %47 : vector<1x8xf32>
    %49 = vector.extract_strided_slice %37 {offsets = [0, 48], sizes = [1, 8], strides = [1, 1]} : vector<1x128xf32> to vector<1x8xf32>
    %50 = arith.addf %48, %49 : vector<1x8xf32>
    %51 = vector.extract_strided_slice %37 {offsets = [0, 56], sizes = [1, 8], strides = [1, 1]} : vector<1x128xf32> to vector<1x8xf32>
    %52 = arith.addf %50, %51 : vector<1x8xf32>
    %53 = vector.extract_strided_slice %37 {offsets = [0, 64], sizes = [1, 8], strides = [1, 1]} : vector<1x128xf32> to vector<1x8xf32>
    %54 = arith.addf %52, %53 : vector<1x8xf32>
    %55 = vector.extract_strided_slice %37 {offsets = [0, 72], sizes = [1, 8], strides = [1, 1]} : vector<1x128xf32> to vector<1x8xf32>
    %56 = arith.addf %54, %55 : vector<1x8xf32>
    %57 = vector.extract_strided_slice %37 {offsets = [0, 80], sizes = [1, 8], strides = [1, 1]} : vector<1x128xf32> to vector<1x8xf32>
    %58 = arith.addf %56, %57 : vector<1x8xf32>
    %59 = vector.extract_strided_slice %37 {offsets = [0, 88], sizes = [1, 8], strides = [1, 1]} : vector<1x128xf32> to vector<1x8xf32>
    %60 = arith.addf %58, %59 : vector<1x8xf32>
    %61 = vector.extract_strided_slice %37 {offsets = [0, 96], sizes = [1, 8], strides = [1, 1]} : vector<1x128xf32> to vector<1x8xf32>
    %62 = arith.addf %60, %61 : vector<1x8xf32>
    %63 = vector.extract_strided_slice %37 {offsets = [0, 104], sizes = [1, 8], strides = [1, 1]} : vector<1x128xf32> to vector<1x8xf32>
    %64 = arith.addf %62, %63 : vector<1x8xf32>
    %65 = vector.extract_strided_slice %37 {offsets = [0, 112], sizes = [1, 8], strides = [1, 1]} : vector<1x128xf32> to vector<1x8xf32>
    %66 = arith.addf %64, %65 : vector<1x8xf32>
    %67 = vector.extract_strided_slice %37 {offsets = [0, 120], sizes = [1, 8], strides = [1, 1]} : vector<1x128xf32> to vector<1x8xf32>
    %68 = arith.addf %66, %67 : vector<1x8xf32>
    %69 = tpu.concatenate %68, %68, %68, %68, %68, %68, %68, %68, %68, %68, %68, %68, %68, %68, %68, %68 in 1 : vector<1x8xf32>, vector<1x8xf32>, vector<1x8xf32>, vector<1x8xf32>, vector<1x8xf32>, vector<1x8xf32>, vector<1x8xf32>, vector<1x8xf32>, vector<1x8xf32>, vector<1x8xf32>, vector<1x8xf32>, vector<1x8xf32>, vector<1x8xf32>, vector<1x8xf32>, vector<1x8xf32>, vector<1x8xf32> -> vector<1x128xf32>
    %cst_11 = arith.constant 0.001953125 : f32
    %70 = vector.broadcast %cst_11 : f32 to vector<1x128xf32>
    %71 = arith.mulf %69, %70 : vector<1x128xf32>
    %72 = vector.broadcast %71 : vector<1x128xf32> to vector<32x128xf32>
    %73 = arith.subf %35, %72 : vector<32x128xf32>
    %74 = arith.mulf %73, %73 : vector<32x128xf32>
    %cst_12 = arith.constant dense<0.000000e+00> : vector<128xf32>
    %75 = vector.multi_reduction <add>, %74, %cst_12 [0] : vector<32x128xf32> to vector<128xf32>
    %76 = vector.shape_cast %75 : vector<128xf32> to vector<1x128xf32>
    %77 = vector.extract_strided_slice %76 {offsets = [0, 0], sizes = [1, 8], strides = [1, 1]} : vector<1x128xf32> to vector<1x8xf32>
    %78 = vector.extract_strided_slice %76 {offsets = [0, 8], sizes = [1, 8], strides = [1, 1]} : vector<1x128xf32> to vector<1x8xf32>
    %79 = arith.addf %77, %78 : vector<1x8xf32>
    %80 = vector.extract_strided_slice %76 {offsets = [0, 16], sizes = [1, 8], strides = [1, 1]} : vector<1x128xf32> to vector<1x8xf32>
    %81 = arith.addf %79, %80 : vector<1x8xf32>
    %82 = vector.extract_strided_slice %76 {offsets = [0, 24], sizes = [1, 8], strides = [1, 1]} : vector<1x128xf32> to vector<1x8xf32>
    %83 = arith.addf %81, %82 : vector<1x8xf32>
    %84 = vector.extract_strided_slice %76 {offsets = [0, 32], sizes = [1, 8], strides = [1, 1]} : vector<1x128xf32> to vector<1x8xf32>
    %85 = arith.addf %83, %84 : vector<1x8xf32>
    %86 = vector.extract_strided_slice %76 {offsets = [0, 40], sizes = [1, 8], strides = [1, 1]} : vector<1x128xf32> to vector<1x8xf32>
    %87 = arith.addf %85, %86 : vector<1x8xf32>
    %88 = vector.extract_strided_slice %76 {offsets = [0, 48], sizes = [1, 8], strides = [1, 1]} : vector<1x128xf32> to vector<1x8xf32>
    %89 = arith.addf %87, %88 : vector<1x8xf32>
    %90 = vector.extract_strided_slice %76 {offsets = [0, 56], sizes = [1, 8], strides = [1, 1]} : vector<1x128xf32> to vector<1x8xf32>
    %91 = arith.addf %89, %90 : vector<1x8xf32>
    %92 = vector.extract_strided_slice %76 {offsets = [0, 64], sizes = [1, 8], strides = [1, 1]} : vector<1x128xf32> to vector<1x8xf32>
    %93 = arith.addf %91, %92 : vector<1x8xf32>
    %94 = vector.extract_strided_slice %76 {offsets = [0, 72], sizes = [1, 8], strides = [1, 1]} : vector<1x128xf32> to vector<1x8xf32>
    %95 = arith.addf %93, %94 : vector<1x8xf32>
    %96 = vector.extract_strided_slice %76 {offsets = [0, 80], sizes = [1, 8], strides = [1, 1]} : vector<1x128xf32> to vector<1x8xf32>
    %97 = arith.addf %95, %96 : vector<1x8xf32>
    %98 = vector.extract_strided_slice %76 {offsets = [0, 88], sizes = [1, 8], strides = [1, 1]} : vector<1x128xf32> to vector<1x8xf32>
    %99 = arith.addf %97, %98 : vector<1x8xf32>
    %100 = vector.extract_strided_slice %76 {offsets = [0, 96], sizes = [1, 8], strides = [1, 1]} : vector<1x128xf32> to vector<1x8xf32>
    %101 = arith.addf %99, %100 : vector<1x8xf32>
    %102 = vector.extract_strided_slice %76 {offsets = [0, 104], sizes = [1, 8], strides = [1, 1]} : vector<1x128xf32> to vector<1x8xf32>
    %103 = arith.addf %101, %102 : vector<1x8xf32>
    %104 = vector.extract_strided_slice %76 {offsets = [0, 112], sizes = [1, 8], strides = [1, 1]} : vector<1x128xf32> to vector<1x8xf32>
    %105 = arith.addf %103, %104 : vector<1x8xf32>
    %106 = vector.extract_strided_slice %76 {offsets = [0, 120], sizes = [1, 8], strides = [1, 1]} : vector<1x128xf32> to vector<1x8xf32>
    %107 = arith.addf %105, %106 : vector<1x8xf32>
    %108 = tpu.concatenate %107, %107, %107, %107, %107, %107, %107, %107, %107, %107, %107, %107, %107, %107, %107, %107 in 1 : vector<1x8xf32>, vector<1x8xf32>, vector<1x8xf32>, vector<1x8xf32>, vector<1x8xf32>, vector<1x8xf32>, vector<1x8xf32>, vector<1x8xf32>, vector<1x8xf32>, vector<1x8xf32>, vector<1x8xf32>, vector<1x8xf32>, vector<1x8xf32>, vector<1x8xf32>, vector<1x8xf32>, vector<1x8xf32> -> vector<1x128xf32>
    %cst_13 = arith.constant 0.001953125 : f32
    %109 = vector.broadcast %cst_13 : f32 to vector<1x128xf32>
    %110 = arith.mulf %108, %109 : vector<1x128xf32>
    %cst_14 = arith.constant 9.99999974E-6 : f32
    %111 = vector.broadcast %cst_14 : f32 to vector<1x128xf32>
    %112 = arith.addf %110, %111 : vector<1x128xf32>
    %113 = math.rsqrt %112 : vector<1x128xf32>
    %c0_15 = arith.constant 0 : index
    %c0_16 = arith.constant 0 : index
    %114 = vector.load %arg2[%c0_15, %c0_16] : memref<1x128xf32, #tpu.memory_space<vmem>>, vector<1x128xf32>
    %115 = arith.mulf %113, %114 : vector<1x128xf32>
    %116 = vector.broadcast %115 : vector<1x128xf32> to vector<32x128xf32>
    %117 = arith.mulf %73, %116 : vector<32x128xf32>
    %c0_17 = arith.constant 0 : index
    %c0_18 = arith.constant 0 : index
    %118 = vector.load %arg3[%c0_17, %c0_18] : memref<1x128xf32, #tpu.memory_space<vmem>>, vector<1x128xf32>
    %119 = vector.broadcast %118 : vector<1x128xf32> to vector<32x128xf32>
    %120 = arith.addf %117, %119 : vector<32x128xf32>
    %cst_19 = arith.constant 0.000000e+00 : f32
    %121 = vector.broadcast %cst_19 : f32 to vector<32x128xf32>
    %122 = arith.maximumf %120, %121 : vector<32x128xf32>
    %c0_i32_20 = arith.constant 0 : i32
    %123 = vector.broadcast %c0_i32_20 : i32 to vector<32x1xi32>
    %124 = arith.cmpi eq, %16, %123 : vector<32x1xi32>
    %c1_i32_21 = arith.constant 1 : i32
    %125 = tpu.dynamic_rotate %122 by %c1_i32_21 dim 0 : vector<32x128xf32>, i32 -> vector<32x128xf32>
    %cst_22 = arith.constant 0.000000e+00 : f32
    %126 = vector.shape_cast %124 : vector<32x1xi1> to vector<32x1xi1>
    %127 = vector.broadcast %126 : vector<32x1xi1> to vector<32x128xi1>
    %128 = vector.broadcast %cst_22 : f32 to vector<32x128xf32>
    %129 = arith.select %127, %128, %125 : vector<32x128xi1>, vector<32x128xf32>
    %c15_i32_23 = arith.constant 15 : i32
    %130 = vector.broadcast %c15_i32_23 : i32 to vector<32x1xi32>
    %131 = arith.cmpi eq, %16, %130 : vector<32x1xi32>
    %c31_i32_24 = arith.constant 31 : i32
    %132 = tpu.dynamic_rotate %122 by %c31_i32_24 dim 0 : vector<32x128xf32>, i32 -> vector<32x128xf32>
    %cst_25 = arith.constant 0.000000e+00 : f32
    %133 = vector.shape_cast %131 : vector<32x1xi1> to vector<32x1xi1>
    %134 = vector.broadcast %133 : vector<32x1xi1> to vector<32x128xi1>
    %135 = vector.broadcast %cst_25 : f32 to vector<32x128xf32>
    %136 = arith.select %134, %135, %132 : vector<32x128xi1>, vector<32x128xf32>
    %137 = tpu.concatenate %129, %122, %136 in 1 : vector<32x128xf32>, vector<32x128xf32>, vector<32x128xf32> -> vector<32x384xf32>
    %138 = arith.truncf %137 : vector<32x384xf32> to vector<32x384xbf16>
    %c0_26 = arith.constant 0 : index
    %c0_27 = arith.constant 0 : index
    %139 = vector.load %arg4[%c0_26, %c0_27] : memref<384x128xbf16, #tpu.memory_space<vmem>>, vector<384x128xbf16>
    %cst_28 = arith.constant dense<0.000000e+00> : vector<32x128xf32>
    %140 = tpu.matmul %138, %139, %cst_28 {dimension_numbers = #tpu.dot_dimension_numbers<[1], [0], [0], [1], [0, 0, 1, 1], [], []>} : vector<32x384xbf16>, vector<384x128xbf16>, vector<32x128xf32> -> vector<32x128xf32>
    %cst_29 = arith.constant dense<0.000000e+00> : vector<128xf32>
    %141 = vector.multi_reduction <add>, %140, %cst_29 [0] : vector<32x128xf32> to vector<128xf32>
    %142 = vector.shape_cast %141 : vector<128xf32> to vector<1x128xf32>
    %143 = vector.extract_strided_slice %142 {offsets = [0, 0], sizes = [1, 8], strides = [1, 1]} : vector<1x128xf32> to vector<1x8xf32>
    %144 = vector.extract_strided_slice %142 {offsets = [0, 8], sizes = [1, 8], strides = [1, 1]} : vector<1x128xf32> to vector<1x8xf32>
    %145 = arith.addf %143, %144 : vector<1x8xf32>
    %146 = vector.extract_strided_slice %142 {offsets = [0, 16], sizes = [1, 8], strides = [1, 1]} : vector<1x128xf32> to vector<1x8xf32>
    %147 = arith.addf %145, %146 : vector<1x8xf32>
    %148 = vector.extract_strided_slice %142 {offsets = [0, 24], sizes = [1, 8], strides = [1, 1]} : vector<1x128xf32> to vector<1x8xf32>
    %149 = arith.addf %147, %148 : vector<1x8xf32>
    %150 = vector.extract_strided_slice %142 {offsets = [0, 32], sizes = [1, 8], strides = [1, 1]} : vector<1x128xf32> to vector<1x8xf32>
    %151 = arith.addf %149, %150 : vector<1x8xf32>
    %152 = vector.extract_strided_slice %142 {offsets = [0, 40], sizes = [1, 8], strides = [1, 1]} : vector<1x128xf32> to vector<1x8xf32>
    %153 = arith.addf %151, %152 : vector<1x8xf32>
    %154 = vector.extract_strided_slice %142 {offsets = [0, 48], sizes = [1, 8], strides = [1, 1]} : vector<1x128xf32> to vector<1x8xf32>
    %155 = arith.addf %153, %154 : vector<1x8xf32>
    %156 = vector.extract_strided_slice %142 {offsets = [0, 56], sizes = [1, 8], strides = [1, 1]} : vector<1x128xf32> to vector<1x8xf32>
    %157 = arith.addf %155, %156 : vector<1x8xf32>
    %158 = vector.extract_strided_slice %142 {offsets = [0, 64], sizes = [1, 8], strides = [1, 1]} : vector<1x128xf32> to vector<1x8xf32>
    %159 = arith.addf %157, %158 : vector<1x8xf32>
    %160 = vector.extract_strided_slice %142 {offsets = [0, 72], sizes = [1, 8], strides = [1, 1]} : vector<1x128xf32> to vector<1x8xf32>
    %161 = arith.addf %159, %160 : vector<1x8xf32>
    %162 = vector.extract_strided_slice %142 {offsets = [0, 80], sizes = [1, 8], strides = [1, 1]} : vector<1x128xf32> to vector<1x8xf32>
    %163 = arith.addf %161, %162 : vector<1x8xf32>
    %164 = vector.extract_strided_slice %142 {offsets = [0, 88], sizes = [1, 8], strides = [1, 1]} : vector<1x128xf32> to vector<1x8xf32>
    %165 = arith.addf %163, %164 : vector<1x8xf32>
    %166 = vector.extract_strided_slice %142 {offsets = [0, 96], sizes = [1, 8], strides = [1, 1]} : vector<1x128xf32> to vector<1x8xf32>
    %167 = arith.addf %165, %166 : vector<1x8xf32>
    %168 = vector.extract_strided_slice %142 {offsets = [0, 104], sizes = [1, 8], strides = [1, 1]} : vector<1x128xf32> to vector<1x8xf32>
    %169 = arith.addf %167, %168 : vector<1x8xf32>
    %170 = vector.extract_strided_slice %142 {offsets = [0, 112], sizes = [1, 8], strides = [1, 1]} : vector<1x128xf32> to vector<1x8xf32>
    %171 = arith.addf %169, %170 : vector<1x8xf32>
    %172 = vector.extract_strided_slice %142 {offsets = [0, 120], sizes = [1, 8], strides = [1, 1]} : vector<1x128xf32> to vector<1x8xf32>
    %173 = arith.addf %171, %172 : vector<1x8xf32>
    %174 = tpu.concatenate %173, %173, %173, %173, %173, %173, %173, %173, %173, %173, %173, %173, %173, %173, %173, %173 in 1 : vector<1x8xf32>, vector<1x8xf32>, vector<1x8xf32>, vector<1x8xf32>, vector<1x8xf32>, vector<1x8xf32>, vector<1x8xf32>, vector<1x8xf32>, vector<1x8xf32>, vector<1x8xf32>, vector<1x8xf32>, vector<1x8xf32>, vector<1x8xf32>, vector<1x8xf32>, vector<1x8xf32>, vector<1x8xf32> -> vector<1x128xf32>
    %cst_30 = arith.constant 0.001953125 : f32
    %175 = vector.broadcast %cst_30 : f32 to vector<1x128xf32>
    %176 = arith.mulf %174, %175 : vector<1x128xf32>
    %177 = vector.broadcast %176 : vector<1x128xf32> to vector<32x128xf32>
    %178 = arith.subf %140, %177 : vector<32x128xf32>
    %179 = arith.mulf %178, %178 : vector<32x128xf32>
    %cst_31 = arith.constant dense<0.000000e+00> : vector<128xf32>
    %180 = vector.multi_reduction <add>, %179, %cst_31 [0] : vector<32x128xf32> to vector<128xf32>
    %181 = vector.shape_cast %180 : vector<128xf32> to vector<1x128xf32>
    %182 = vector.extract_strided_slice %181 {offsets = [0, 0], sizes = [1, 8], strides = [1, 1]} : vector<1x128xf32> to vector<1x8xf32>
    %183 = vector.extract_strided_slice %181 {offsets = [0, 8], sizes = [1, 8], strides = [1, 1]} : vector<1x128xf32> to vector<1x8xf32>
    %184 = arith.addf %182, %183 : vector<1x8xf32>
    %185 = vector.extract_strided_slice %181 {offsets = [0, 16], sizes = [1, 8], strides = [1, 1]} : vector<1x128xf32> to vector<1x8xf32>
    %186 = arith.addf %184, %185 : vector<1x8xf32>
    %187 = vector.extract_strided_slice %181 {offsets = [0, 24], sizes = [1, 8], strides = [1, 1]} : vector<1x128xf32> to vector<1x8xf32>
    %188 = arith.addf %186, %187 : vector<1x8xf32>
    %189 = vector.extract_strided_slice %181 {offsets = [0, 32], sizes = [1, 8], strides = [1, 1]} : vector<1x128xf32> to vector<1x8xf32>
    %190 = arith.addf %188, %189 : vector<1x8xf32>
    %191 = vector.extract_strided_slice %181 {offsets = [0, 40], sizes = [1, 8], strides = [1, 1]} : vector<1x128xf32> to vector<1x8xf32>
    %192 = arith.addf %190, %191 : vector<1x8xf32>
    %193 = vector.extract_strided_slice %181 {offsets = [0, 48], sizes = [1, 8], strides = [1, 1]} : vector<1x128xf32> to vector<1x8xf32>
    %194 = arith.addf %192, %193 : vector<1x8xf32>
    %195 = vector.extract_strided_slice %181 {offsets = [0, 56], sizes = [1, 8], strides = [1, 1]} : vector<1x128xf32> to vector<1x8xf32>
    %196 = arith.addf %194, %195 : vector<1x8xf32>
    %197 = vector.extract_strided_slice %181 {offsets = [0, 64], sizes = [1, 8], strides = [1, 1]} : vector<1x128xf32> to vector<1x8xf32>
    %198 = arith.addf %196, %197 : vector<1x8xf32>
    %199 = vector.extract_strided_slice %181 {offsets = [0, 72], sizes = [1, 8], strides = [1, 1]} : vector<1x128xf32> to vector<1x8xf32>
    %200 = arith.addf %198, %199 : vector<1x8xf32>
    %201 = vector.extract_strided_slice %181 {offsets = [0, 80], sizes = [1, 8], strides = [1, 1]} : vector<1x128xf32> to vector<1x8xf32>
    %202 = arith.addf %200, %201 : vector<1x8xf32>
    %203 = vector.extract_strided_slice %181 {offsets = [0, 88], sizes = [1, 8], strides = [1, 1]} : vector<1x128xf32> to vector<1x8xf32>
    %204 = arith.addf %202, %203 : vector<1x8xf32>
    %205 = vector.extract_strided_slice %181 {offsets = [0, 96], sizes = [1, 8], strides = [1, 1]} : vector<1x128xf32> to vector<1x8xf32>
    %206 = arith.addf %204, %205 : vector<1x8xf32>
    %207 = vector.extract_strided_slice %181 {offsets = [0, 104], sizes = [1, 8], strides = [1, 1]} : vector<1x128xf32> to vector<1x8xf32>
    %208 = arith.addf %206, %207 : vector<1x8xf32>
    %209 = vector.extract_strided_slice %181 {offsets = [0, 112], sizes = [1, 8], strides = [1, 1]} : vector<1x128xf32> to vector<1x8xf32>
    %210 = arith.addf %208, %209 : vector<1x8xf32>
    %211 = vector.extract_strided_slice %181 {offsets = [0, 120], sizes = [1, 8], strides = [1, 1]} : vector<1x128xf32> to vector<1x8xf32>
    %212 = arith.addf %210, %211 : vector<1x8xf32>
    %213 = tpu.concatenate %212, %212, %212, %212, %212, %212, %212, %212, %212, %212, %212, %212, %212, %212, %212, %212 in 1 : vector<1x8xf32>, vector<1x8xf32>, vector<1x8xf32>, vector<1x8xf32>, vector<1x8xf32>, vector<1x8xf32>, vector<1x8xf32>, vector<1x8xf32>, vector<1x8xf32>, vector<1x8xf32>, vector<1x8xf32>, vector<1x8xf32>, vector<1x8xf32>, vector<1x8xf32>, vector<1x8xf32>, vector<1x8xf32> -> vector<1x128xf32>
    %cst_32 = arith.constant 0.001953125 : f32
    %214 = vector.broadcast %cst_32 : f32 to vector<1x128xf32>
    %215 = arith.mulf %213, %214 : vector<1x128xf32>
    %cst_33 = arith.constant 9.99999974E-6 : f32
    %216 = vector.broadcast %cst_33 : f32 to vector<1x128xf32>
    %217 = arith.addf %215, %216 : vector<1x128xf32>
    %218 = math.rsqrt %217 : vector<1x128xf32>
    %c0_34 = arith.constant 0 : index
    %c0_35 = arith.constant 0 : index
    %219 = vector.load %arg5[%c0_34, %c0_35] : memref<1x128xf32, #tpu.memory_space<vmem>>, vector<1x128xf32>
    %220 = arith.mulf %218, %219 : vector<1x128xf32>
    %221 = vector.broadcast %220 : vector<1x128xf32> to vector<32x128xf32>
    %222 = arith.mulf %178, %221 : vector<32x128xf32>
    %c0_36 = arith.constant 0 : index
    %c0_37 = arith.constant 0 : index
    %223 = vector.load %arg6[%c0_36, %c0_37] : memref<1x128xf32, #tpu.memory_space<vmem>>, vector<1x128xf32>
    %224 = vector.broadcast %223 : vector<1x128xf32> to vector<32x128xf32>
    %225 = arith.addf %222, %224 : vector<32x128xf32>
    %cst_38 = arith.constant 0.000000e+00 : f32
    %226 = vector.broadcast %cst_38 : f32 to vector<32x128xf32>
    %227 = arith.maximumf %225, %226 : vector<32x128xf32>
    %c0_39 = arith.constant 0 : index
    %c0_40 = arith.constant 0 : index
    %228 = vector.load %arg7[%c0_39, %c0_40] : memref<32x128xf32, #tpu.memory_space<vmem>>, vector<32x128xf32>
    tpu.vector_store %arg7[%c0_39, %c0_40], %227 {strides = array<i32>} : memref<32x128xf32, #tpu.memory_space<vmem>>, vector<32x128xf32>,
    return
  }
}

</mosaic_0001>

<llo_original>
// kernel: double_conv_forward.1
$region0: #{double_conv_forward.1}
  #allocation0 [shape = 'u32[]', space=smem, size = 0x4, offset = 0x4, fixed_abs, tag = 'smem constant byte address 0x4 - core index']
  #allocation1 [shape = 'u32[144,128]{1,0:T(1,128)}', space=vmem, size = 0x12000, scoped, tag = 'internal scratch']
  %s0 = inlined_call_operand.vmem [shape: f32[32,128], index: 0, kind: input, shape index: {}]
  %s1 = inlined_call_operand.vmem [shape: bf16[384,128], index: 1, kind: input, shape index: {}]
  %s2 = inlined_call_operand.vmem [shape: f32[1,128], index: 2, kind: input, shape index: {}]
  %s3 = inlined_call_operand.vmem [shape: f32[1,128], index: 3, kind: input, shape index: {}]
  %s4 = inlined_call_operand.vmem [shape: bf16[384,128], index: 4, kind: input, shape index: {}]
  %s5 = inlined_call_operand.vmem [shape: f32[1,128], index: 5, kind: input, shape index: {}]
  %s6 = inlined_call_operand.vmem [shape: f32[1,128], index: 6, kind: input, shape index: {}]
  %s7 = inlined_call_operand.vmem [shape: f32[32,128], index: 7, kind: output, shape index: {}]
  %s8 = sld [smem:[#allocation0]]
  $region38: #{double_conv_forward.1} parent=0
    _
  %s10 = ssub.s32 1, %s8
  %s11 = scalar_select 0, %s10, %s8
  // Predicated region
  $region2: #{double_conv_forward.1} parent=0 // pred_check
    _
  $region3: #{double_conv_forward.1} parent=0 // pred_check_branch
    %13 = sbr.rel (0) target = $region5
  $region4: #{double_conv_forward.1} parent=0 // pred_region
    _
  $region5: #{double_conv_forward.1} parent=0 // pred_fallthru
    _
  // Predicated region
  $region6: #{double_conv_forward.1} parent=0 // pred_check
    _
  $region7: #{double_conv_forward.1} parent=0 // pred_check_branch
    %15 = sbr.rel (0) target = $region9
  $region8: #{double_conv_forward.1} parent=0 // pred_region
    _
  $region9: #{double_conv_forward.1} parent=0 // pred_fallthru
    _
  // Predicated region
  $region10: #{double_conv_forward.1} parent=0 // pred_check
    _
  $region11: #{double_conv_forward.1} parent=0 // pred_check_branch
    %17 = sbr.rel (0) target = $region13
  $region12: #{double_conv_forward.1} parent=0 // pred_region
    _
  $region13: #{double_conv_forward.1} parent=0 // pred_fallthru
    _
  // Predicated region
  $region14: #{double_conv_forward.1} parent=0 // pred_check
    _
  $region15: #{double_conv_forward.1} parent=0 // pred_check_branch
    %19 = sbr.rel (0) target = $region17
  $region16: #{double_conv_forward.1} parent=0 // pred_region
    _
  $region17: #{double_conv_forward.1} parent=0 // pred_fallthru
    _
  // Predicated region
  $region18: #{double_conv_forward.1} parent=0 // pred_check
    _
  $region19: #{double_conv_forward.1} parent=0 // pred_check_branch
    %21 = sbr.rel (0) target = $region21
  $region20: #{double_conv_forward.1} parent=0 // pred_region
    _
  $region21: #{double_conv_forward.1} parent=0 // pred_fallthru
    _
  // Predicated region
  $region22: #{double_conv_forward.1} parent=0 // pred_check
    _
  $region23: #{double_conv_forward.1} parent=0 // pred_check_branch
    %23 = sbr.rel (0) target = $region25
  $region24: #{double_conv_forward.1} parent=0 // pred_region
    _
  $region25: #{double_conv_forward.1} parent=0 // pred_fallthru
    _
  // Predicated region
  $region26: #{double_conv_forward.1} parent=0 // pred_check
    _
  $region27: #{double_conv_forward.1} parent=0 // pred_check_branch
    %25 = sbr.rel (0) target = $region29
  $region28: #{double_conv_forward.1} parent=0 // pred_region
    _
  $region29: #{double_conv_forward.1} parent=0 // pred_fallthru
    _
  %v27 = vlaneseq
  %v28 = vshrl.u32 %v27, 7
  %v29 = vadd.s32 %v28, 8
  %v30 = vadd.s32 %v28, 16
  %v31 = vadd.s32 %v28, 24
  %vm32 = vcmp.lt.s32.totalorder %v28, 0
  %v33 = vsub.s32 0, %v28
  %v34 = vsel %vm32, %v33, %v28
  %v35 = vshrl.u32 %v34, 4
  %v36 = vand.u32 %v34, 15
  %v37 = vsub.s32 0, %v36
  %v38 = vsel %vm32, %v37, %v36
  %vm39 = vcmp.lt.s32.totalorder %v29, 0
  %v40 = vsub.s32 0, %v29
  %v41 = vsel %vm39, %v40, %v29
  %v42 = vshrl.u32 %v41, 4
  %v43 = vand.u32 %v41, 15
  %v44 = vsub.s32 0, %v43
  %v45 = vsel %vm39, %v44, %v43
  %vm46 = vcmp.lt.s32.totalorder %v30, 0
  %v47 = vsub.s32 0, %v30
  %v48 = vsel %vm46, %v47, %v30
  %v49 = vshrl.u32 %v48, 4
  %v50 = vand.u32 %v48, 15
  %v51 = vsub.s32 0, %v50
  %v52 = vsel %vm46, %v51, %v50
  %vm53 = vcmp.lt.s32.totalorder %v31, 0
  %v54 = vsub.s32 0, %v31
  %v55 = vsel %vm53, %v54, %v31
  %v56 = vshrl.u32 %v55, 4
  %v57 = vand.u32 %v55, 15
  %v58 = vsub.s32 0, %v57
  %v59 = vsel %vm53, %v58, %v57
  %vm60 = vcmp.ne.s32.totalorder %v38, 0
  %vm61 = vcmp.ne.s32.totalorder %v45, 0
  %vm62 = vcmp.ne.s32.totalorder %v52, 0
  %vm63 = vcmp.ne.s32.totalorder %v59, 0
  %vm64 = vcmp.lt.s32.totalorder %v38, 0
  %vm65 = vcmp.lt.s32.totalorder %v45, 0
  %vm66 = vcmp.lt.s32.totalorder %v52, 0
  %vm67 = vcmp.lt.s32.totalorder %v59, 0
  %vm68 = vmand %vm64, %vm60
  %vm69 = vmand %vm65, %vm61
  %vm70 = vmand %vm66, %vm62
  %vm71 = vmand %vm67, %vm63
  %v72 = vadd.s32 %v38, 16
  %v73 = vadd.s32 %v45, 16
  %v74 = vadd.s32 %v52, 16
  %v75 = vadd.s32 %v59, 16
  %v76 = vsel %vm68, %v72, %v38
  %v77 = vsel %vm69, %v73, %v45
  %v78 = vsel %vm70, %v74, %v52
  %v79 = vsel %vm71, %v75, %v59
  %v80 = vld [vmem:[%s0] sm:$0xff]
  %v81 = vld [vmem:[%s0 + $0x8] sm:$0xff]
  %v82 = vld [vmem:[%s0 + $0x10] sm:$0xff]
  %v83 = vld [vmem:[%s0 + $0x18] sm:$0xff]
  %vm84 = vcmp.eq.s32.totalorder %v76, 0
  %vm85 = vcmp.eq.s32.totalorder %v77, 0
  %vm86 = vcmp.eq.s32.totalorder %v78, 0
  %vm87 = vcmp.eq.s32.totalorder %v79, 0
  %v88 = vrot.slane %v80, 7
  %v89 = vrot.slane %v81, 7
  %v90 = vrot.slane %v82, 7
  %v91 = vrot.slane %v83, 7
  %vm92 = vcmp.lt.s32.totalorder %v28, 1
  %v93 = vsel %vm92, %v90, %v91
  %v94 = vsel %vm92, %v89, %v90
  %v95 = vsel %vm92, %v88, %v89
  %v96 = vsel %vm92, %v91, %v88
  %v97 = vsel %vm84, 1, 0
  %v98 = vsel %vm85, 1, 0
  %v99 = vsel %vm86, 1, 0
  %v100 = vsel %vm87, 1, 0
  %vm101 = vcmp.eq.s32.totalorder %v97, 1
  %vm102 = vcmp.eq.s32.totalorder %v98, 1
  %vm103 = vcmp.eq.s32.totalorder %v99, 1
  %vm104 = vcmp.eq.s32.totalorder %v100, 1
  %v105 = vsel %vm101, 0.0, %v96
  %v106 = vsel %vm102, 0.0, %v95
  %v107 = vsel %vm103, 0.0, %v94
  %v108 = vsel %vm104, 0.0, %v93
  %vm109 = vcmp.eq.s32.totalorder %v76, 15
  %vm110 = vcmp.eq.s32.totalorder %v77, 15
  %vm111 = vcmp.eq.s32.totalorder %v78, 15
  %vm112 = vcmp.eq.s32.totalorder %v79, 15
  %v113 = vrot.slane %v80, 1
  %v114 = vrot.slane %v81, 1
  %v115 = vrot.slane %v82, 1
  %v116 = vrot.slane %v83, 1
  %vm117 = vcmp.lt.s32.totalorder %v28, 7
  %v118 = vsel %vm117, %v115, %v116
  %v119 = vsel %vm117, %v114, %v115
  %v120 = vsel %vm117, %v113, %v114
  %v121 = vsel %vm117, %v116, %v113
  %v122 = vsel %vm109, 1, 0
  %v123 = vsel %vm110, 1, 0
  %v124 = vsel %vm111, 1, 0
  %v125 = vsel %vm112, 1, 0
  %vm126 = vcmp.eq.s32.totalorder %v122, 1
  %vm127 = vcmp.eq.s32.totalorder %v123, 1
  %vm128 = vcmp.eq.s32.totalorder %v124, 1
  %vm129 = vcmp.eq.s32.totalorder %v125, 1
  %v130 = vsel %vm126, 0.0, %v120
  %v131 = vsel %vm127, 0.0, %v119
  %v132 = vsel %vm128, 0.0, %v118
  %v133 = vsel %vm129, 0.0, %v121
  %v134 = vpack.c.bf16 %v106, %v105
  %v135 = vpack.c.bf16 %v81, %v80
  %v136 = vpack.c.bf16 %v131, %v130
  %v137 = vpack.c.bf16 %v108, %v107
  %v138 = vpack.c.bf16 %v83, %v82
  %v139 = vpack.c.bf16 %v133, %v132
  %v140 = vld [vmem:[%s1] sm:$0xf]
  %v141 = vld [vmem:[%s1 + $0x4] sm:$0xf]
  %v142 = vld [vmem:[%s1 + $0x8] sm:$0xf]
  %v143 = vld [vmem:[%s1 + $0xc] sm:$0xf]
  %v144 = vld [vmem:[%s1 + $0x10] sm:$0xf]
  %v145 = vld [vmem:[%s1 + $0x14] sm:$0xf]
  %v146 = vld [vmem:[%s1 + $0x18] sm:$0xf]
  %v147 = vld [vmem:[%s1 + $0x1c] sm:$0xf]
  %v148 = vld [vmem:[%s1 + $0x20] sm:$0xf]
  %v149 = vld [vmem:[%s1 + $0x24] sm:$0xf]
  %v150 = vld [vmem:[%s1 + $0x28] sm:$0xf]
  %v151 = vld [vmem:[%s1 + $0x2c] sm:$0xf]
  %v152 = vld [vmem:[%s1 + $0x30] sm:$0xf]
  %v153 = vld [vmem:[%s1 + $0x34] sm:$0xf]
  %v154 = vld [vmem:[%s1 + $0x38] sm:$0xf]
  %v155 = vld [vmem:[%s1 + $0x3c] sm:$0xf]
  %v156 = vld [vmem:[%s1 + $0x40] sm:$0xf]
  %v157 = vld [vmem:[%s1 + $0x44] sm:$0xf]
  %v158 = vld [vmem:[%s1 + $0x48] sm:$0xf]
  %v159 = vld [vmem:[%s1 + $0x4c] sm:$0xf]
  %v160 = vld [vmem:[%s1 + $0x50] sm:$0xf]
  %v161 = vld [vmem:[%s1 + $0x54] sm:$0xf]
  %v162 = vld [vmem:[%s1 + $0x58] sm:$0xf]
  %v163 = vld [vmem:[%s1 + $0x5c] sm:$0xf]
  %v164 = vld [vmem:[%s1 + $0x60] sm:$0xf]
  %v165 = vld [vmem:[%s1 + $0x64] sm:$0xf]
  %v166 = vld [vmem:[%s1 + $0x68] sm:$0xf]
  %v167 = vld [vmem:[%s1 + $0x6c] sm:$0xf]
  %v168 = vld [vmem:[%s1 + $0x70] sm:$0xf]
  %v169 = vld [vmem:[%s1 + $0x74] sm:$0xf]
  %v170 = vld [vmem:[%s1 + $0x78] sm:$0xf]
  %v171 = vld [vmem:[%s1 + $0x7c] sm:$0xf]
  %v172 = vld [vmem:[%s1 + $0x80] sm:$0xf]
  %v173 = vld [vmem:[%s1 + $0x84] sm:$0xf]
  %v174 = vld [vmem:[%s1 + $0x88] sm:$0xf]
  %v175 = vld [vmem:[%s1 + $0x8c] sm:$0xf]
  %v176 = vld [vmem:[%s1 + $0x90] sm:$0xf]
  %v177 = vld [vmem:[%s1 + $0x94] sm:$0xf]
  %v178 = vld [vmem:[%s1 + $0x98] sm:$0xf]
  %v179 = vld [vmem:[%s1 + $0x9c] sm:$0xf]
  %v180 = vld [vmem:[%s1 + $0xa0] sm:$0xf]
  %v181 = vld [vmem:[%s1 + $0xa4] sm:$0xf]
  %v182 = vld [vmem:[%s1 + $0xa8] sm:$0xf]
  %v183 = vld [vmem:[%s1 + $0xac] sm:$0xf]
  %v184 = vld [vmem:[%s1 + $0xb0] sm:$0xf]
  %v185 = vld [vmem:[%s1 + $0xb4] sm:$0xf]
  %v186 = vld [vmem:[%s1 + $0xb8] sm:$0xf]
  %v187 = vld [vmem:[%s1 + $0xbc] sm:$0xf]
  %v236 = vunpack.c.l.b16 %v140
  %v237 = vunpack.c.l.b16 %v141
  %v238 = vunpack.c.l.b16 %v142
  %v239 = vunpack.c.l.b16 %v143
  %v240 = vunpack.c.l.b16 %v144
  %v241 = vunpack.c.l.b16 %v145
  %v242 = vunpack.c.l.b16 %v146
  %v243 = vunpack.c.l.b16 %v147
  %v244 = vunpack.c.l.b16 %v148
  %v245 = vunpack.c.l.b16 %v149
  %v246 = vunpack.c.l.b16 %v150
  %v247 = vunpack.c.l.b16 %v151
  %v248 = vunpack.c.l.b16 %v152
  %v249 = vunpack.c.l.b16 %v153
  %v250 = vunpack.c.l.b16 %v154
  %v251 = vunpack.c.l.b16 %v155
  %v252 = vunpack.c.l.b16 %v156
  %v253 = vunpack.c.l.b16 %v157
  %v254 = vunpack.c.l.b16 %v158
  %v255 = vunpack.c.l.b16 %v159
  %v256 = vunpack.c.l.b16 %v160
  %v257 = vunpack.c.l.b16 %v161
  %v258 = vunpack.c.l.b16 %v162
  %v259 = vunpack.c.l.b16 %v163
  %v260 = vunpack.c.l.b16 %v164
  %v261 = vunpack.c.l.b16 %v165
  %v262 = vunpack.c.l.b16 %v166
  %v263 = vunpack.c.l.b16 %v167
  %v264 = vunpack.c.l.b16 %v168
  %v265 = vunpack.c.l.b16 %v169
  %v266 = vunpack.c.l.b16 %v170
  %v267 = vunpack.c.l.b16 %v171
  %v268 = vunpack.c.l.b16 %v172
  %v269 = vunpack.c.l.b16 %v173
  %v270 = vunpack.c.l.b16 %v174
  %v271 = vunpack.c.l.b16 %v175
  %v272 = vunpack.c.l.b16 %v176
  %v273 = vunpack.c.l.b16 %v177
  %v274 = vunpack.c.l.b16 %v178
  %v275 = vunpack.c.l.b16 %v179
  %v276 = vunpack.c.l.b16 %v180
  %v277 = vunpack.c.l.b16 %v181
  %v278 = vunpack.c.l.b16 %v182
  %v279 = vunpack.c.l.b16 %v183
  %v280 = vunpack.c.l.b16 %v184
  %v281 = vunpack.c.l.b16 %v185
  %v282 = vunpack.c.l.b16 %v186
  %v283 = vunpack.c.l.b16 %v187
  %v284 = vpack.c.b16 %v237, %v236
  %v285 = vpack.c.b16 %v239, %v238
  %v286 = vpack.c.b16 %v241, %v240
  %v287 = vpack.c.b16 %v243, %v242
  %v288 = vpack.c.b16 %v245, %v244
  %v289 = vpack.c.b16 %v247, %v246
  %v290 = vpack.c.b16 %v249, %v248
  %v291 = vpack.c.b16 %v251, %v250
  %v292 = vpack.c.b16 %v253, %v252
  %v293 = vpack.c.b16 %v255, %v254
  %v294 = vpack.c.b16 %v257, %v256
  %v295 = vpack.c.b16 %v259, %v258
  %v296 = vpack.c.b16 %v261, %v260
  %v297 = vpack.c.b16 %v263, %v262
  %v298 = vpack.c.b16 %v265, %v264
  %v299 = vpack.c.b16 %v267, %v266
  %v300 = vpack.c.b16 %v269, %v268
  %v301 = vpack.c.b16 %v271, %v270
  %v302 = vpack.c.b16 %v273, %v272
  %v303 = vpack.c.b16 %v275, %v274
  %v304 = vpack.c.b16 %v277, %v276
  %v305 = vpack.c.b16 %v279, %v278
  %v306 = vpack.c.b16 %v281, %v280
  %v307 = vpack.c.b16 %v283, %v282
  %332 = vmatprep.subr.bf16.mxu0 0
  %333 = vmatpush1.bf16.msra.mxu0 %v284
  %334 = vmatprep.subr.bf16.mxu0 0
  %335 = vmatpush1.bf16.msra.mxu0 %v285
  %336 = vmatprep.subr.bf16.mxu0 0
  %337 = vmatpush1.bf16.msra.mxu0 %v286
  %338 = vmatprep.subr.bf16.mxu0 0
  %339 = vmatpush1.bf16.msra.mxu0 %v287
  %340 = vmatprep.subr.bf16.mxu0 0
  %341 = vmatpush1.bf16.msra.mxu0 %v288
  %342 = vmatprep.subr.bf16.mxu0 0
  %343 = vmatpush1.bf16.msra.mxu0 %v289
  %344 = vmatprep.subr.bf16.mxu0 0
  %345 = vmatpush1.bf16.msra.mxu0 %v290
  %346 = vmatprep.subr.bf16.mxu0 0
  %347 = vmatpush1.bf16.msra.mxu0 %v291
  %348 = vmatprep.subr.bf16.mxu0 0
  %349 = vmatpush1.bf16.msra.mxu0 %v292
  %350 = vmatprep.subr.bf16.mxu0 0
  %351 = vmatpush1.bf16.msra.mxu0 %v293
  %352 = vmatprep.subr.bf16.mxu0 0
  %353 = vmatpush1.bf16.msra.mxu0 %v294
  %354 = vmatprep.subr.bf16.mxu0 0
  %355 = vmatpush1.bf16.msra.mxu0 %v295
  %356 = vmatprep.subr.bf16.mxu0 0
  %357 = vmatpush1.bf16.msra.mxu0 %v296
  %358 = vmatprep.subr.bf16.mxu0 0
  %359 = vmatpush1.bf16.msra.mxu0 %v297
  %360 = vmatprep.subr.bf16.mxu0 0
  %361 = vmatpush1.bf16.msra.mxu0 %v298
  %362 = vmatprep.subr.bf16.mxu0 0
  %363 = vmatpush1.bf16.msra.mxu0 %v299
  %364 = vmatprep.mubr.bf16.mxu0 %v135
  %365 = vmatmul.mubr.bf16.gmra.mrb[0].mxu0 %v134
  %v366 = vpop.f32.mrb[0].mxu0
  %v367 = vadd.f32 0.0, %v366
  %v368 = vpop.f32.mrb[0].mxu0
  %v369 = vpop.f32.mrb[0].mxu0
  %v370 = vadd.f32 0.0, %v369
  %v371 = vpop.f32.mrb[0].mxu0
  %372 = vmatprep.mubr.bf16.mxu0 %v138
  %373 = vmatmul.mubr.bf16.gmra.mrb[0].mxu0 %v137
  %v374 = vpop.f32.mrb[0].mxu0
  %v375 = vadd.f32 0.0, %v374
  %v376 = vpop.f32.mrb[0].mxu0
  %v377 = vpop.f32.mrb[0].mxu0
  %v378 = vadd.f32 0.0, %v377
  %v379 = vpop.f32.mrb[0].mxu0
  %380 = vdwg.mxu0
  %381 = vmatprep.subr.bf16.mxu0 0
  %382 = vmatpush1.bf16.msra.mxu0 %v300
  %383 = vmatprep.subr.bf16.mxu0 0
  %384 = vmatpush1.bf16.msra.mxu0 %v301
  %385 = vmatprep.subr.bf16.mxu0 0
  %386 = vmatpush1.bf16.msra.mxu0 %v302
  %387 = vmatprep.subr.bf16.mxu0 0
  %388 = vmatpush1.bf16.msra.mxu0 %v303
  %389 = vmatprep.subr.bf16.mxu0 0
  %390 = vmatpush1.bf16.msra.mxu0 %v304
  %391 = vmatprep.subr.bf16.mxu0 0
  %392 = vmatpush1.bf16.msra.mxu0 %v305
  %393 = vmatprep.subr.bf16.mxu0 0
  %394 = vmatpush1.bf16.msra.mxu0 %v306
  %395 = vmatprep.subr.bf16.mxu0 0
  %396 = vmatpush1.bf16.msra.mxu0 %v307
  %397 = vmatprep.subr.bf16.mxu0 0
  %398 = vmatpush1.bf16.msra.mxu0 0
  %399 = vmatprep.subr.bf16.mxu0 0
  %400 = vmatpush1.bf16.msra.mxu0 0
  %401 = vmatprep.subr.bf16.mxu0 0
  %402 = vmatpush1.bf16.msra.mxu0 0
  %403 = vmatprep.subr.bf16.mxu0 0
  %404 = vmatpush1.bf16.msra.mxu0 0
  %405 = vmatprep.subr.bf16.mxu0 0
  %406 = vmatpush1.bf16.msra.mxu0 0
  %407 = vmatprep.subr.bf16.mxu0 0
  %408 = vmatpush1.bf16.msra.mxu0 0
  %409 = vmatprep.subr.bf16.mxu0 0
  %410 = vmatpush1.bf16.msra.mxu0 0
  %411 = vmatprep.subr.bf16.mxu0 0
  %412 = vmatpush1.bf16.msra.mxu0 0
  %413 = vmatprep.mubr.bf16.mxu0 0
  %414 = vmatmul.mubr.bf16.gmra.mrb[0].mxu0 %v136
  %v415 = vpop.f32.mrb[0].mxu0
  %v416 = vadd.f32 %v367, %v415
  %v417 = vpop.f32.mrb[0].mxu0
  %v418 = vpop.f32.mrb[0].mxu0
  %v419 = vadd.f32 %v370, %v418
  %v420 = vpop.f32.mrb[0].mxu0
  %421 = vmatprep.mubr.bf16.mxu0 0
  %422 = vmatmul.mubr.bf16.gmra.mrb[0].mxu0 %v139
  %v423 = vpop.f32.mrb[0].mxu0
  %v424 = vadd.f32 %v375, %v423
  %v425 = vpop.f32.mrb[0].mxu0
  %v426 = vpop.f32.mrb[0].mxu0
  %v427 = vadd.f32 %v378, %v426
  %v428 = vpop.f32.mrb[0].mxu0
  %429 = vdwg.mxu0
  %v430 = vadd.f32 %v416, %v419
  %v431 = vadd.f32 %v430, %v424
  %v432 = vadd.f32 %v431, %v427
  %v433 = vrot.slane %v432, 4
  %v434 = vadd.f32 %v432, %v433
  %v435 = vrot.slane %v434, 2
  %v436 = vadd.f32 %v434, %v435
  %v437 = vrot.slane %v436, 1
  %v438 = vadd.f32 %v436, %v437
  %440 = vrot.lane.b32.xlu0 %v438, 120
  %v441 = vpop.permute.xlu0 %440
  %v443 = vadd.f32 %v438, %v441
  %444 = vrot.lane.b32.xlu0 %v438, 112
  %v445 = vpop.permute.xlu0 %444
  %v447 = vadd.f32 %v443, %v445
  %448 = vrot.lane.b32.xlu0 %v438, 104
  %v449 = vpop.permute.xlu0 %448
  %v451 = vadd.f32 %v447, %v449
  %452 = vrot.lane.b32.xlu0 %v438, 96
  %v453 = vpop.permute.xlu0 %452
  %v455 = vadd.f32 %v451, %v453
  %456 = vrot.lane.b32.xlu0 %v438, 88
  %v457 = vpop.permute.xlu0 %456
  %v459 = vadd.f32 %v455, %v457
  %460 = vrot.lane.b32.xlu0 %v438, 80
  %v461 = vpop.permute.xlu0 %460
  %v463 = vadd.f32 %v459, %v461
  %464 = vrot.lane.b32.xlu0 %v438, 72
  %v465 = vpop.permute.xlu0 %464
  %v467 = vadd.f32 %v463, %v465
  %468 = vrot.lane.b32.xlu0 %v438, 64
  %v469 = vpop.permute.xlu0 %468
  %v471 = vadd.f32 %v467, %v469
  %472 = vrot.lane.b32.xlu0 %v438, 56
  %v473 = vpop.permute.xlu0 %472
  %v475 = vadd.f32 %v471, %v473
  %476 = vrot.lane.b32.xlu0 %v438, 48
  %v477 = vpop.permute.xlu0 %476
  %v479 = vadd.f32 %v475, %v477
  %480 = vrot.lane.b32.xlu0 %v438, 40
  %v481 = vpop.permute.xlu0 %480
  %v483 = vadd.f32 %v479, %v481
  %484 = vrot.lane.b32.xlu0 %v438, 32
  %v485 = vpop.permute.xlu0 %484
  %v487 = vadd.f32 %v483, %v485
  %488 = vrot.lane.b32.xlu0 %v438, 24
  %v489 = vpop.permute.xlu0 %488
  %v491 = vadd.f32 %v487, %v489
  %492 = vrot.lane.b32.xlu0 %v438, 16
  %v493 = vpop.permute.xlu0 %492
  %v495 = vadd.f32 %v491, %v493
  %496 = vrot.lane.b32.xlu0 %v438, 8
  %v497 = vpop.permute.xlu0 %496
  %v499 = vadd.f32 %v495, %v497
  %501 = vrot.lane.b32.xlu0 %v499, 8
  %v502 = vpop.permute.xlu0 %501
  %504 = vrot.lane.b32.xlu0 %v499, 16
  %v505 = vpop.permute.xlu0 %504
  %507 = vrot.lane.b32.xlu0 %v499, 24
  %v508 = vpop.permute.xlu0 %507
  %510 = vrot.lane.b32.xlu0 %v499, 32
  %v511 = vpop.permute.xlu0 %510
  %513 = vrot.lane.b32.xlu0 %v499, 40
  %v514 = vpop.permute.xlu0 %513
  %516 = vrot.lane.b32.xlu0 %v499, 48
  %v517 = vpop.permute.xlu0 %516
  %519 = vrot.lane.b32.xlu0 %v499, 56
  %v520 = vpop.permute.xlu0 %519
  %522 = vrot.lane.b32.xlu0 %v499, 64
  %v523 = vpop.permute.xlu0 %522
  %525 = vrot.lane.b32.xlu0 %v499, 72
  %v526 = vpop.permute.xlu0 %525
  %528 = vrot.lane.b32.xlu0 %v499, 80
  %v529 = vpop.permute.xlu0 %528
  %531 = vrot.lane.b32.xlu0 %v499, 88
  %v532 = vpop.permute.xlu0 %531
  %534 = vrot.lane.b32.xlu0 %v499, 96
  %v535 = vpop.permute.xlu0 %534
  %537 = vrot.lane.b32.xlu0 %v499, 104
  %v538 = vpop.permute.xlu0 %537
  %540 = vrot.lane.b32.xlu0 %v499, 112
  %v541 = vpop.permute.xlu0 %540
  %543 = vrot.lane.b32.xlu0 %v499, 120
  %v544 = vpop.permute.xlu0 %543
  %vm546 = vcmask 64512
  %v547 = vsel %vm546, %v499, %v502
  %vm548 = vcmask 130048
  %v549 = vsel %vm548, %v547, %v505
  %vm550 = vcmask 195584
  %v551 = vsel %vm550, %v549, %v508
  %vm552 = vcmask 261120
  %v553 = vsel %vm552, %v551, %v511
  %vm554 = vcmask 326656
  %v555 = vsel %vm554, %v553, %v514
  %vm556 = vcmask 392192
  %v557 = vsel %vm556, %v555, %v517
  %vm558 = vcmask 457728
  %v559 = vsel %vm558, %v557, %v520
  %vm560 = vcmask 523264
  %v561 = vsel %vm560, %v559, %v523
  %vm562 = vcmask 588800
  %v563 = vsel %vm562, %v561, %v526
  %vm564 = vcmask 654336
  %v565 = vsel %vm564, %v563, %v529
  %vm566 = vcmask 719872
  %v567 = vsel %vm566, %v565, %v532
  %vm568 = vcmask 785408
  %v569 = vsel %vm568, %v567, %v535
  %vm570 = vcmask 850944
  %v571 = vsel %vm570, %v569, %v538
  %vm572 = vcmask 916480
  %v573 = vsel %vm572, %v571, %v541
  %vm574 = vcmask 982016
  %v575 = vsel %vm574, %v573, %v544
  %v576 = vmul.f32 %v575, 0.001953125
  %v577 = vlaneseq
  %v578 = vshrl.u32 %v577, 7
  %v579 = vsub.s32 0, %v578
  %v580 = vrot.slane %v576, %v579
  %v581 = vsub.f32 %v416, %v580
  %v582 = vsub.f32 %v419, %v580
  %v583 = vsub.f32 %v424, %v580
  %v584 = vsub.f32 %v427, %v580
  %v585 = vmul.f32 %v581, %v581
  %v586 = vmul.f32 %v582, %v582
  %v587 = vmul.f32 %v583, %v583
  %v588 = vmul.f32 %v584, %v584
  %v589 = vadd.f32 %v585, %v586
  %v590 = vadd.f32 %v589, %v587
  %v591 = vadd.f32 %v590, %v588
  %v592 = vrot.slane %v591, 4
  %v593 = vadd.f32 %v591, %v592
  %v594 = vrot.slane %v593, 2
  %v595 = vadd.f32 %v593, %v594
  %v596 = vrot.slane %v595, 1
  %v597 = vadd.f32 %v595, %v596
  %599 = vrot.lane.b32.xlu0 %v597, 120
  %v600 = vpop.permute.xlu0 %599
  %v602 = vadd.f32 %v597, %v600
  %603 = vrot.lane.b32.xlu0 %v597, 112
  %v604 = vpop.permute.xlu0 %603
  %v606 = vadd.f32 %v602, %v604
  %607 = vrot.lane.b32.xlu0 %v597, 104
  %v608 = vpop.permute.xlu0 %607
  %v610 = vadd.f32 %v606, %v608
  %611 = vrot.lane.b32.xlu0 %v597, 96
  %v612 = vpop.permute.xlu0 %611
  %v614 = vadd.f32 %v610, %v612
  %615 = vrot.lane.b32.xlu0 %v597, 88
  %v616 = vpop.permute.xlu0 %615
  %v618 = vadd.f32 %v614, %v616
  %619 = vrot.lane.b32.xlu0 %v597, 80
  %v620 = vpop.permute.xlu0 %619
  %v622 = vadd.f32 %v618, %v620
  %623 = vrot.lane.b32.xlu0 %v597, 72
  %v624 = vpop.permute.xlu0 %623
  %v626 = vadd.f32 %v622, %v624
  %627 = vrot.lane.b32.xlu0 %v597, 64
  %v628 = vpop.permute.xlu0 %627
  %v630 = vadd.f32 %v626, %v628
  %631 = vrot.lane.b32.xlu0 %v597, 56
  %v632 = vpop.permute.xlu0 %631
  %v634 = vadd.f32 %v630, %v632
  %635 = vrot.lane.b32.xlu0 %v597, 48
  %v636 = vpop.permute.xlu0 %635
  %v638 = vadd.f32 %v634, %v636
  %639 = vrot.lane.b32.xlu0 %v597, 40
  %v640 = vpop.permute.xlu0 %639
  %v642 = vadd.f32 %v638, %v640
  %643 = vrot.lane.b32.xlu0 %v597, 32
  %v644 = vpop.permute.xlu0 %643
  %v646 = vadd.f32 %v642, %v644
  %647 = vrot.lane.b32.xlu0 %v597, 24
  %v648 = vpop.permute.xlu0 %647
  %v650 = vadd.f32 %v646, %v648
  %651 = vrot.lane.b32.xlu0 %v597, 16
  %v652 = vpop.permute.xlu0 %651
  %v654 = vadd.f32 %v650, %v652
  %655 = vrot.lane.b32.xlu0 %v597, 8
  %v656 = vpop.permute.xlu0 %655
  %v658 = vadd.f32 %v654, %v656
  %660 = vrot.lane.b32.xlu0 %v658, 8
  %v661 = vpop.permute.xlu0 %660
  %663 = vrot.lane.b32.xlu0 %v658, 16
  %v664 = vpop.permute.xlu0 %663
  %666 = vrot.lane.b32.xlu0 %v658, 24
  %v667 = vpop.permute.xlu0 %666
  %669 = vrot.lane.b32.xlu0 %v658, 32
  %v670 = vpop.permute.xlu0 %669
  %672 = vrot.lane.b32.xlu0 %v658, 40
  %v673 = vpop.permute.xlu0 %672
  %675 = vrot.lane.b32.xlu0 %v658, 48
  %v676 = vpop.permute.xlu0 %675
  %678 = vrot.lane.b32.xlu0 %v658, 56
  %v679 = vpop.permute.xlu0 %678
  %681 = vrot.lane.b32.xlu0 %v658, 64
  %v682 = vpop.permute.xlu0 %681
  %684 = vrot.lane.b32.xlu0 %v658, 72
  %v685 = vpop.permute.xlu0 %684
  %687 = vrot.lane.b32.xlu0 %v658, 80
  %v688 = vpop.permute.xlu0 %687
  %690 = vrot.lane.b32.xlu0 %v658, 88
  %v691 = vpop.permute.xlu0 %690
  %693 = vrot.lane.b32.xlu0 %v658, 96
  %v694 = vpop.permute.xlu0 %693
  %696 = vrot.lane.b32.xlu0 %v658, 104
  %v697 = vpop.permute.xlu0 %696
  %699 = vrot.lane.b32.xlu0 %v658, 112
  %v700 = vpop.permute.xlu0 %699
  %702 = vrot.lane.b32.xlu0 %v658, 120
  %v703 = vpop.permute.xlu0 %702
  %v705 = vsel %vm546, %v658, %v661
  %v706 = vsel %vm548, %v705, %v664
  %v707 = vsel %vm550, %v706, %v667
  %v708 = vsel %vm552, %v707, %v670
  %v709 = vsel %vm554, %v708, %v673
  %v710 = vsel %vm556, %v709, %v676
  %v711 = vsel %vm558, %v710, %v679
  %v712 = vsel %vm560, %v711, %v682
  %v713 = vsel %vm562, %v712, %v685
  %v714 = vsel %vm564, %v713, %v688
  %v715 = vsel %vm566, %v714, %v691
  %v716 = vsel %vm568, %v715, %v694
  %v717 = vsel %vm570, %v716, %v697
  %v718 = vsel %vm572, %v717, %v700
  %v719 = vsel %vm574, %v718, %v703
  %v720 = vmul.f32 %v719, 0.001953125
  %v721 = vadd.f32 %v720, 1e-05
  %v722 = vrsqrt.pop %v721
  %v723 = vld [vmem:[%s2] sm:$0x1]
  %v724 = vmul.f32 %v722, %v723
  %v725 = vlaneseq
  %v726 = vshrl.u32 %v725, 7
  %v727 = vsub.s32 0, %v726
  %v728 = vrot.slane %v724, %v727
  %v729 = vmul.f32 %v581, %v728
  %v730 = vmul.f32 %v582, %v728
  %v731 = vmul.f32 %v583, %v728
  %v732 = vmul.f32 %v584, %v728
  %v733 = vld [vmem:[%s3] sm:$0x1]
  %v735 = vlaneseq
  %v736 = vshrl.u32 %v735, 7
  %v737 = vsub.s32 0, %v736
  %v738 = vrot.slane %v733, %v737
  %v740 = vadd.f32 %v729, %v738
  %v741 = vadd.f32 %v730, %v738
  %v742 = vadd.f32 %v731, %v738
  %v743 = vadd.f32 %v732, %v738
  %v744 = vmax.f32 %v740, 0.0
  %v745 = vmax.f32 %v741, 0.0
  %v746 = vmax.f32 %v742, 0.0
  %v747 = vmax.f32 %v743, 0.0
  %v748 = vrot.slane %v744, 7
  %v749 = vrot.slane %v745, 7
  %v750 = vrot.slane %v746, 7
  %v751 = vrot.slane %v747, 7
  %v752 = vsel %vm92, %v750, %v751
  %v753 = vsel %vm92, %v749, %v750
  %v754 = vsel %vm92, %v748, %v749
  %v755 = vsel %vm92, %v751, %v748
  %v756 = vsel %vm101, 0.0, %v755
  %v757 = vsel %vm102, 0.0, %v754
  %v758 = vsel %vm103, 0.0, %v753
  %v759 = vsel %vm104, 0.0, %v752
  %v760 = vrot.slane %v744, 1
  %v761 = vrot.slane %v745, 1
  %v762 = vrot.slane %v746, 1
  %v763 = vrot.slane %v747, 1
  %v764 = vsel %vm117, %v762, %v763
  %v765 = vsel %vm117, %v761, %v762
  %v766 = vsel %vm117, %v760, %v761
  %v767 = vsel %vm117, %v763, %v760
  %v768 = vsel %vm126, 0.0, %v766
  %v769 = vsel %vm127, 0.0, %v765
  %v770 = vsel %vm128, 0.0, %v764
  %v771 = vsel %vm129, 0.0, %v767
  %v772 = vpack.c.bf16 %v757, %v756
  %v773 = vpack.c.bf16 %v745, %v744
  %v774 = vpack.c.bf16 %v769, %v768
  %v775 = vpack.c.bf16 %v759, %v758
  %v776 = vpack.c.bf16 %v747, %v746
  %v777 = vpack.c.bf16 %v771, %v770
  %v778 = vld [vmem:[%s4] sm:$0xf]
  %v779 = vld [vmem:[%s4 + $0x4] sm:$0xf]
  %v780 = vld [vmem:[%s4 + $0x8] sm:$0xf]
  %v781 = vld [vmem:[%s4 + $0xc] sm:$0xf]
  %v782 = vld [vmem:[%s4 + $0x10] sm:$0xf]
  %v783 = vld [vmem:[%s4 + $0x14] sm:$0xf]
  %v784 = vld [vmem:[%s4 + $0x18] sm:$0xf]
  %v785 = vld [vmem:[%s4 + $0x1c] sm:$0xf]
  %v786 = vld [vmem:[%s4 + $0x20] sm:$0xf]
  %v787 = vld [vmem:[%s4 + $0x24] sm:$0xf]
  %v788 = vld [vmem:[%s4 + $0x28] sm:$0xf]
  %v789 = vld [vmem:[%s4 + $0x2c] sm:$0xf]
  %v790 = vld [vmem:[%s4 + $0x30] sm:$0xf]
  %v791 = vld [vmem:[%s4 + $0x34] sm:$0xf]
  %v792 = vld [vmem:[%s4 + $0x38] sm:$0xf]
  %v793 = vld [vmem:[%s4 + $0x3c] sm:$0xf]
  %v794 = vld [vmem:[%s4 + $0x40] sm:$0xf]
  %v795 = vld [vmem:[%s4 + $0x44] sm:$0xf]
  %v796 = vld [vmem:[%s4 + $0x48] sm:$0xf]
  %v797 = vld [vmem:[%s4 + $0x4c] sm:$0xf]
  %v798 = vld [vmem:[%s4 + $0x50] sm:$0xf]
  %v799 = vld [vmem:[%s4 + $0x54] sm:$0xf]
  %v800 = vld [vmem:[%s4 + $0x58] sm:$0xf]
  %v801 = vld [vmem:[%s4 + $0x5c] sm:$0xf]
  %v802 = vld [vmem:[%s4 + $0x60] sm:$0xf]
  %v803 = vld [vmem:[%s4 + $0x64] sm:$0xf]
  %v804 = vld [vmem:[%s4 + $0x68] sm:$0xf]
  %v805 = vld [vmem:[%s4 + $0x6c] sm:$0xf]
  %v806 = vld [vmem:[%s4 + $0x70] sm:$0xf]
  %v807 = vld [vmem:[%s4 + $0x74] sm:$0xf]
  %v808 = vld [vmem:[%s4 + $0x78] sm:$0xf]
  %v809 = vld [vmem:[%s4 + $0x7c] sm:$0xf]
  %v810 = vld [vmem:[%s4 + $0x80] sm:$0xf]
  %v811 = vld [vmem:[%s4 + $0x84] sm:$0xf]
  %v812 = vld [vmem:[%s4 + $0x88] sm:$0xf]
  %v813 = vld [vmem:[%s4 + $0x8c] sm:$0xf]
  %v814 = vld [vmem:[%s4 + $0x90] sm:$0xf]
  %v815 = vld [vmem:[%s4 + $0x94] sm:$0xf]
  %v816 = vld [vmem:[%s4 + $0x98] sm:$0xf]
  %v817 = vld [vmem:[%s4 + $0x9c] sm:$0xf]
  %v818 = vld [vmem:[%s4 + $0xa0] sm:$0xf]
  %v819 = vld [vmem:[%s4 + $0xa4] sm:$0xf]
  %v820 = vld [vmem:[%s4 + $0xa8] sm:$0xf]
  %v821 = vld [vmem:[%s4 + $0xac] sm:$0xf]
  %v822 = vld [vmem:[%s4 + $0xb0] sm:$0xf]
  %v823 = vld [vmem:[%s4 + $0xb4] sm:$0xf]
  %v824 = vld [vmem:[%s4 + $0xb8] sm:$0xf]
  %v825 = vld [vmem:[%s4 + $0xbc] sm:$0xf]
  %v874 = vunpack.c.l.b16 %v778
  %v875 = vunpack.c.l.b16 %v779
  %v876 = vunpack.c.l.b16 %v780
  %v877 = vunpack.c.l.b16 %v781
  %v878 = vunpack.c.l.b16 %v782
  %v879 = vunpack.c.l.b16 %v783
  %v880 = vunpack.c.l.b16 %v784
  %v881 = vunpack.c.l.b16 %v785
  %v882 = vunpack.c.l.b16 %v786
  %v883 = vunpack.c.l.b16 %v787
  %v884 = vunpack.c.l.b16 %v788
  %v885 = vunpack.c.l.b16 %v789
  %v886 = vunpack.c.l.b16 %v790
  %v887 = vunpack.c.l.b16 %v791
  %v888 = vunpack.c.l.b16 %v792
  %v889 = vunpack.c.l.b16 %v793
  %v890 = vunpack.c.l.b16 %v794
  %v891 = vunpack.c.l.b16 %v795
  %v892 = vunpack.c.l.b16 %v796
  %v893 = vunpack.c.l.b16 %v797
  %v894 = vunpack.c.l.b16 %v798
  %v895 = vunpack.c.l.b16 %v799
  %v896 = vunpack.c.l.b16 %v800
  %v897 = vunpack.c.l.b16 %v801
  %v898 = vunpack.c.l.b16 %v802
  %v899 = vunpack.c.l.b16 %v803
  %v900 = vunpack.c.l.b16 %v804
  %v901 = vunpack.c.l.b16 %v805
  %v902 = vunpack.c.l.b16 %v806
  %v903 = vunpack.c.l.b16 %v807
  %v904 = vunpack.c.l.b16 %v808
  %v905 = vunpack.c.l.b16 %v809
  %v906 = vunpack.c.l.b16 %v810
  %v907 = vunpack.c.l.b16 %v811
  %v908 = vunpack.c.l.b16 %v812
  %v909 = vunpack.c.l.b16 %v813
  %v910 = vunpack.c.l.b16 %v814
  %v911 = vunpack.c.l.b16 %v815
  %v912 = vunpack.c.l.b16 %v816
  %v913 = vunpack.c.l.b16 %v817
  %v914 = vunpack.c.l.b16 %v818
  %v915 = vunpack.c.l.b16 %v819
  %v916 = vunpack.c.l.b16 %v820
  %v917 = vunpack.c.l.b16 %v821
  %v918 = vunpack.c.l.b16 %v822
  %v919 = vunpack.c.l.b16 %v823
  %v920 = vunpack.c.l.b16 %v824
  %v921 = vunpack.c.l.b16 %v825
  %v922 = vpack.c.b16 %v875, %v874
  %v923 = vpack.c.b16 %v877, %v876
  %v924 = vpack.c.b16 %v879, %v878
  %v925 = vpack.c.b16 %v881, %v880
  %v926 = vpack.c.b16 %v883, %v882
  %v927 = vpack.c.b16 %v885, %v884
  %v928 = vpack.c.b16 %v887, %v886
  %v929 = vpack.c.b16 %v889, %v888
  %v930 = vpack.c.b16 %v891, %v890
  %v931 = vpack.c.b16 %v893, %v892
  %v932 = vpack.c.b16 %v895, %v894
  %v933 = vpack.c.b16 %v897, %v896
  %v934 = vpack.c.b16 %v899, %v898
  %v935 = vpack.c.b16 %v901, %v900
  %v936 = vpack.c.b16 %v903, %v902
  %v937 = vpack.c.b16 %v905, %v904
  %v938 = vpack.c.b16 %v907, %v906
  %v939 = vpack.c.b16 %v909, %v908
  %v940 = vpack.c.b16 %v911, %v910
  %v941 = vpack.c.b16 %v913, %v912
  %v942 = vpack.c.b16 %v915, %v914
  %v943 = vpack.c.b16 %v917, %v916
  %v944 = vpack.c.b16 %v919, %v918
  %v945 = vpack.c.b16 %v921, %v920
  %970 = vmatprep.subr.bf16.mxu0 0
  %971 = vmatpush1.bf16.msra.mxu0 %v922
  %972 = vmatprep.subr.bf16.mxu0 0
  %973 = vmatpush1.bf16.msra.mxu0 %v923
  %974 = vmatprep.subr.bf16.mxu0 0
  %975 = vmatpush1.bf16.msra.mxu0 %v924
  %976 = vmatprep.subr.bf16.mxu0 0
  %977 = vmatpush1.bf16.msra.mxu0 %v925
  %978 = vmatprep.subr.bf16.mxu0 0
  %979 = vmatpush1.bf16.msra.mxu0 %v926
  %980 = vmatprep.subr.bf16.mxu0 0
  %981 = vmatpush1.bf16.msra.mxu0 %v927
  %982 = vmatprep.subr.bf16.mxu0 0
  %983 = vmatpush1.bf16.msra.mxu0 %v928
  %984 = vmatprep.subr.bf16.mxu0 0
  %985 = vmatpush1.bf16.msra.mxu0 %v929
  %986 = vmatprep.subr.bf16.mxu0 0
  %987 = vmatpush1.bf16.msra.mxu0 %v930
  %988 = vmatprep.subr.bf16.mxu0 0
  %989 = vmatpush1.bf16.msra.mxu0 %v931
  %990 = vmatprep.subr.bf16.mxu0 0
  %991 = vmatpush1.bf16.msra.mxu0 %v932
  %992 = vmatprep.subr.bf16.mxu0 0
  %993 = vmatpush1.bf16.msra.mxu0 %v933
  %994 = vmatprep.subr.bf16.mxu0 0
  %995 = vmatpush1.bf16.msra.mxu0 %v934
  %996 = vmatprep.subr.bf16.mxu0 0
  %997 = vmatpush1.bf16.msra.mxu0 %v935
  %998 = vmatprep.subr.bf16.mxu0 0
  %999 = vmatpush1.bf16.msra.mxu0 %v936
  %1000 = vmatprep.subr.bf16.mxu0 0
  %1001 = vmatpush1.bf16.msra.mxu0 %v937
  %1002 = vmatprep.mubr.bf16.mxu0 %v773
  %1003 = vmatmul.mubr.bf16.gmra.mrb[0].mxu0 %v772
  %v1004 = vpop.f32.mrb[0].mxu0
  %v1005 = vadd.f32 0.0, %v1004
  %v1006 = vpop.f32.mrb[0].mxu0
  %v1007 = vpop.f32.mrb[0].mxu0
  %v1008 = vadd.f32 0.0, %v1007
  %v1009 = vpop.f32.mrb[0].mxu0
  %1010 = vmatprep.mubr.bf16.mxu0 %v776
  %1011 = vmatmul.mubr.bf16.gmra.mrb[0].mxu0 %v775
  %v1012 = vpop.f32.mrb[0].mxu0
  %v1013 = vadd.f32 0.0, %v1012
  %v1014 = vpop.f32.mrb[0].mxu0
  %v1015 = vpop.f32.mrb[0].mxu0
  %v1016 = vadd.f32 0.0, %v1015
  %v1017 = vpop.f32.mrb[0].mxu0
  %1018 = vdwg.mxu0
  %1019 = vmatprep.subr.bf16.mxu0 0
  %1020 = vmatpush1.bf16.msra.mxu0 %v938
  %1021 = vmatprep.subr.bf16.mxu0 0
  %1022 = vmatpush1.bf16.msra.mxu0 %v939
  %1023 = vmatprep.subr.bf16.mxu0 0
  %1024 = vmatpush1.bf16.msra.mxu0 %v940
  %1025 = vmatprep.subr.bf16.mxu0 0
  %1026 = vmatpush1.bf16.msra.mxu0 %v941
  %1027 = vmatprep.subr.bf16.mxu0 0
  %1028 = vmatpush1.bf16.msra.mxu0 %v942
  %1029 = vmatprep.subr.bf16.mxu0 0
  %1030 = vmatpush1.bf16.msra.mxu0 %v943
  %1031 = vmatprep.subr.bf16.mxu0 0
  %1032 = vmatpush1.bf16.msra.mxu0 %v944
  %1033 = vmatprep.subr.bf16.mxu0 0
  %1034 = vmatpush1.bf16.msra.mxu0 %v945
  %1035 = vmatprep.subr.bf16.mxu0 0
  %1036 = vmatpush1.bf16.msra.mxu0 0
  %1037 = vmatprep.subr.bf16.mxu0 0
  %1038 = vmatpush1.bf16.msra.mxu0 0
  %1039 = vmatprep.subr.bf16.mxu0 0
  %1040 = vmatpush1.bf16.msra.mxu0 0
  %1041 = vmatprep.subr.bf16.mxu0 0
  %1042 = vmatpush1.bf16.msra.mxu0 0
  %1043 = vmatprep.subr.bf16.mxu0 0
  %1044 = vmatpush1.bf16.msra.mxu0 0
  %1045 = vmatprep.subr.bf16.mxu0 0
  %1046 = vmatpush1.bf16.msra.mxu0 0
  %1047 = vmatprep.subr.bf16.mxu0 0
  %1048 = vmatpush1.bf16.msra.mxu0 0
  %1049 = vmatprep.subr.bf16.mxu0 0
  %1050 = vmatpush1.bf16.msra.mxu0 0
  %1051 = vmatprep.mubr.bf16.mxu0 0
  %1052 = vmatmul.mubr.bf16.gmra.mrb[0].mxu0 %v774
  %v1053 = vpop.f32.mrb[0].mxu0
  %v1054 = vadd.f32 %v1005, %v1053
  %v1055 = vpop.f32.mrb[0].mxu0
  %v1056 = vpop.f32.mrb[0].mxu0
  %v1057 = vadd.f32 %v1008, %v1056
  %v1058 = vpop.f32.mrb[0].mxu0
  %1059 = vmatprep.mubr.bf16.mxu0 0
  %1060 = vmatmul.mubr.bf16.gmra.mrb[0].mxu0 %v777
  %v1061 = vpop.f32.mrb[0].mxu0
  %v1062 = vadd.f32 %v1013, %v1061
  %v1063 = vpop.f32.mrb[0].mxu0
  %v1064 = vpop.f32.mrb[0].mxu0
  %v1065 = vadd.f32 %v1016, %v1064
  %v1066 = vpop.f32.mrb[0].mxu0
  %1067 = vdwg.mxu0
  %v1068 = vadd.f32 %v1054, %v1057
  %v1069 = vadd.f32 %v1068, %v1062
  %v1070 = vadd.f32 %v1069, %v1065
  %v1071 = vrot.slane %v1070, 4
  %v1072 = vadd.f32 %v1070, %v1071
  %v1073 = vrot.slane %v1072, 2
  %v1074 = vadd.f32 %v1072, %v1073
  %v1075 = vrot.slane %v1074, 1
  %v1076 = vadd.f32 %v1074, %v1075
  %1078 = vrot.lane.b32.xlu0 %v1076, 120
  %v1079 = vpop.permute.xlu0 %1078
  %v1081 = vadd.f32 %v1076, %v1079
  %1082 = vrot.lane.b32.xlu0 %v1076, 112
  %v1083 = vpop.permute.xlu0 %1082
  %v1085 = vadd.f32 %v1081, %v1083
  %1086 = vrot.lane.b32.xlu0 %v1076, 104
  %v1087 = vpop.permute.xlu0 %1086
  %v1089 = vadd.f32 %v1085, %v1087
  %1090 = vrot.lane.b32.xlu0 %v1076, 96
  %v1091 = vpop.permute.xlu0 %1090
  %v1093 = vadd.f32 %v1089, %v1091
  %1094 = vrot.lane.b32.xlu0 %v1076, 88
  %v1095 = vpop.permute.xlu0 %1094
  %v1097 = vadd.f32 %v1093, %v1095
  %1098 = vrot.lane.b32.xlu0 %v1076, 80
  %v1099 = vpop.permute.xlu0 %1098
  %v1101 = vadd.f32 %v1097, %v1099
  %1102 = vrot.lane.b32.xlu0 %v1076, 72
  %v1103 = vpop.permute.xlu0 %1102
  %v1105 = vadd.f32 %v1101, %v1103
  %1106 = vrot.lane.b32.xlu0 %v1076, 64
  %v1107 = vpop.permute.xlu0 %1106
  %v1109 = vadd.f32 %v1105, %v1107
  %1110 = vrot.lane.b32.xlu0 %v1076, 56
  %v1111 = vpop.permute.xlu0 %1110
  %v1113 = vadd.f32 %v1109, %v1111
  %1114 = vrot.lane.b32.xlu0 %v1076, 48
  %v1115 = vpop.permute.xlu0 %1114
  %v1117 = vadd.f32 %v1113, %v1115
  %1118 = vrot.lane.b32.xlu0 %v1076, 40
  %v1119 = vpop.permute.xlu0 %1118
  %v1121 = vadd.f32 %v1117, %v1119
  %1122 = vrot.lane.b32.xlu0 %v1076, 32
  %v1123 = vpop.permute.xlu0 %1122
  %v1125 = vadd.f32 %v1121, %v1123
  %1126 = vrot.lane.b32.xlu0 %v1076, 24
  %v1127 = vpop.permute.xlu0 %1126
  %v1129 = vadd.f32 %v1125, %v1127
  %1130 = vrot.lane.b32.xlu0 %v1076, 16
  %v1131 = vpop.permute.xlu0 %1130
  %v1133 = vadd.f32 %v1129, %v1131
  %1134 = vrot.lane.b32.xlu0 %v1076, 8
  %v1135 = vpop.permute.xlu0 %1134
  %v1137 = vadd.f32 %v1133, %v1135
  %1139 = vrot.lane.b32.xlu0 %v1137, 8
  %v1140 = vpop.permute.xlu0 %1139
  %1142 = vrot.lane.b32.xlu0 %v1137, 16
  %v1143 = vpop.permute.xlu0 %1142
  %1145 = vrot.lane.b32.xlu0 %v1137, 24
  %v1146 = vpop.permute.xlu0 %1145
  %1148 = vrot.lane.b32.xlu0 %v1137, 32
  %v1149 = vpop.permute.xlu0 %1148
  %1151 = vrot.lane.b32.xlu0 %v1137, 40
  %v1152 = vpop.permute.xlu0 %1151
  %1154 = vrot.lane.b32.xlu0 %v1137, 48
  %v1155 = vpop.permute.xlu0 %1154
  %1157 = vrot.lane.b32.xlu0 %v1137, 56
  %v1158 = vpop.permute.xlu0 %1157
  %1160 = vrot.lane.b32.xlu0 %v1137, 64
  %v1161 = vpop.permute.xlu0 %1160
  %1163 = vrot.lane.b32.xlu0 %v1137, 72
  %v1164 = vpop.permute.xlu0 %1163
  %1166 = vrot.lane.b32.xlu0 %v1137, 80
  %v1167 = vpop.permute.xlu0 %1166
  %1169 = vrot.lane.b32.xlu0 %v1137, 88
  %v1170 = vpop.permute.xlu0 %1169
  %1172 = vrot.lane.b32.xlu0 %v1137, 96
  %v1173 = vpop.permute.xlu0 %1172
  %1175 = vrot.lane.b32.xlu0 %v1137, 104
  %v1176 = vpop.permute.xlu0 %1175
  %1178 = vrot.lane.b32.xlu0 %v1137, 112
  %v1179 = vpop.permute.xlu0 %1178
  %1181 = vrot.lane.b32.xlu0 %v1137, 120
  %v1182 = vpop.permute.xlu0 %1181
  %v1184 = vsel %vm546, %v1137, %v1140
  %v1185 = vsel %vm548, %v1184, %v1143
  %v1186 = vsel %vm550, %v1185, %v1146
  %v1187 = vsel %vm552, %v1186, %v1149
  %v1188 = vsel %vm554, %v1187, %v1152
  %v1189 = vsel %vm556, %v1188, %v1155
  %v1190 = vsel %vm558, %v1189, %v1158
  %v1191 = vsel %vm560, %v1190, %v1161
  %v1192 = vsel %vm562, %v1191, %v1164
  %v1193 = vsel %vm564, %v1192, %v1167
  %v1194 = vsel %vm566, %v1193, %v1170
  %v1195 = vsel %vm568, %v1194, %v1173
  %v1196 = vsel %vm570, %v1195, %v1176
  %v1197 = vsel %vm572, %v1196, %v1179
  %v1198 = vsel %vm574, %v1197, %v1182
  %v1199 = vmul.f32 %v1198, 0.001953125
  %v1200 = vlaneseq
  %v1201 = vshrl.u32 %v1200, 7
  %v1202 = vsub.s32 0, %v1201
  %v1203 = vrot.slane %v1199, %v1202
  %v1204 = vsub.f32 %v1054, %v1203
  %v1205 = vsub.f32 %v1057, %v1203
  %v1206 = vsub.f32 %v1062, %v1203
  %v1207 = vsub.f32 %v1065, %v1203
  %v1208 = vmul.f32 %v1204, %v1204
  %v1209 = vmul.f32 %v1205, %v1205
  %v1210 = vmul.f32 %v1206, %v1206
  %v1211 = vmul.f32 %v1207, %v1207
  %v1212 = vadd.f32 %v1208, %v1209
  %v1213 = vadd.f32 %v1212, %v1210
  %v1214 = vadd.f32 %v1213, %v1211
  %v1215 = vrot.slane %v1214, 4
  %v1216 = vadd.f32 %v1214, %v1215
  %v1217 = vrot.slane %v1216, 2
  %v1218 = vadd.f32 %v1216, %v1217
  %v1219 = vrot.slane %v1218, 1
  %v1220 = vadd.f32 %v1218, %v1219
  %1222 = vrot.lane.b32.xlu0 %v1220, 120
  %v1223 = vpop.permute.xlu0 %1222
  %v1225 = vadd.f32 %v1220, %v1223
  %1226 = vrot.lane.b32.xlu0 %v1220, 112
  %v1227 = vpop.permute.xlu0 %1226
  %v1229 = vadd.f32 %v1225, %v1227
  %1230 = vrot.lane.b32.xlu0 %v1220, 104
  %v1231 = vpop.permute.xlu0 %1230
  %v1233 = vadd.f32 %v1229, %v1231
  %1234 = vrot.lane.b32.xlu0 %v1220, 96
  %v1235 = vpop.permute.xlu0 %1234
  %v1237 = vadd.f32 %v1233, %v1235
  %1238 = vrot.lane.b32.xlu0 %v1220, 88
  %v1239 = vpop.permute.xlu0 %1238
  %v1241 = vadd.f32 %v1237, %v1239
  %1242 = vrot.lane.b32.xlu0 %v1220, 80
  %v1243 = vpop.permute.xlu0 %1242
  %v1245 = vadd.f32 %v1241, %v1243
  %1246 = vrot.lane.b32.xlu0 %v1220, 72
  %v1247 = vpop.permute.xlu0 %1246
  %v1249 = vadd.f32 %v1245, %v1247
  %1250 = vrot.lane.b32.xlu0 %v1220, 64
  %v1251 = vpop.permute.xlu0 %1250
  %v1253 = vadd.f32 %v1249, %v1251
  %1254 = vrot.lane.b32.xlu0 %v1220, 56
  %v1255 = vpop.permute.xlu0 %1254
  %v1257 = vadd.f32 %v1253, %v1255
  %1258 = vrot.lane.b32.xlu0 %v1220, 48
  %v1259 = vpop.permute.xlu0 %1258
  %v1261 = vadd.f32 %v1257, %v1259
  %1262 = vrot.lane.b32.xlu0 %v1220, 40
  %v1263 = vpop.permute.xlu0 %1262
  %v1265 = vadd.f32 %v1261, %v1263
  %1266 = vrot.lane.b32.xlu0 %v1220, 32
  %v1267 = vpop.permute.xlu0 %1266
  %v1269 = vadd.f32 %v1265, %v1267
  %1270 = vrot.lane.b32.xlu0 %v1220, 24
  %v1271 = vpop.permute.xlu0 %1270
  %v1273 = vadd.f32 %v1269, %v1271
  %1274 = vrot.lane.b32.xlu0 %v1220, 16
  %v1275 = vpop.permute.xlu0 %1274
  %v1277 = vadd.f32 %v1273, %v1275
  %1278 = vrot.lane.b32.xlu0 %v1220, 8
  %v1279 = vpop.permute.xlu0 %1278
  %v1281 = vadd.f32 %v1277, %v1279
  %1283 = vrot.lane.b32.xlu0 %v1281, 8
  %v1284 = vpop.permute.xlu0 %1283
  %1286 = vrot.lane.b32.xlu0 %v1281, 16
  %v1287 = vpop.permute.xlu0 %1286
  %1289 = vrot.lane.b32.xlu0 %v1281, 24
  %v1290 = vpop.permute.xlu0 %1289
  %1292 = vrot.lane.b32.xlu0 %v1281, 32
  %v1293 = vpop.permute.xlu0 %1292
  %1295 = vrot.lane.b32.xlu0 %v1281, 40
  %v1296 = vpop.permute.xlu0 %1295
  %1298 = vrot.lane.b32.xlu0 %v1281, 48
  %v1299 = vpop.permute.xlu0 %1298
  %1301 = vrot.lane.b32.xlu0 %v1281, 56
  %v1302 = vpop.permute.xlu0 %1301
  %1304 = vrot.lane.b32.xlu0 %v1281, 64
  %v1305 = vpop.permute.xlu0 %1304
  %1307 = vrot.lane.b32.xlu0 %v1281, 72
  %v1308 = vpop.permute.xlu0 %1307
  %1310 = vrot.lane.b32.xlu0 %v1281, 80
  %v1311 = vpop.permute.xlu0 %1310
  %1313 = vrot.lane.b32.xlu0 %v1281, 88
  %v1314 = vpop.permute.xlu0 %1313
  %1316 = vrot.lane.b32.xlu0 %v1281, 96
  %v1317 = vpop.permute.xlu0 %1316
  %1319 = vrot.lane.b32.xlu0 %v1281, 104
  %v1320 = vpop.permute.xlu0 %1319
  %1322 = vrot.lane.b32.xlu0 %v1281, 112
  %v1323 = vpop.permute.xlu0 %1322
  %1325 = vrot.lane.b32.xlu0 %v1281, 120
  %v1326 = vpop.permute.xlu0 %1325
  %v1328 = vsel %vm546, %v1281, %v1284
  %v1329 = vsel %vm548, %v1328, %v1287
  %v1330 = vsel %vm550, %v1329, %v1290
  %v1331 = vsel %vm552, %v1330, %v1293
  %v1332 = vsel %vm554, %v1331, %v1296
  %v1333 = vsel %vm556, %v1332, %v1299
  %v1334 = vsel %vm558, %v1333, %v1302
  %v1335 = vsel %vm560, %v1334, %v1305
  %v1336 = vsel %vm562, %v1335, %v1308
  %v1337 = vsel %vm564, %v1336, %v1311
  %v1338 = vsel %vm566, %v1337, %v1314
  %v1339 = vsel %vm568, %v1338, %v1317
  %v1340 = vsel %vm570, %v1339, %v1320
  %v1341 = vsel %vm572, %v1340, %v1323
  %v1342 = vsel %vm574, %v1341, %v1326
  %v1343 = vmul.f32 %v1342, 0.001953125
  %v1344 = vadd.f32 %v1343, 1e-05
  %v1345 = vrsqrt.pop %v1344
  %v1346 = vld [vmem:[%s5] sm:$0x1]
  %v1347 = vmul.f32 %v1345, %v1346
  %v1348 = vlaneseq
  %v1349 = vshrl.u32 %v1348, 7
  %v1350 = vsub.s32 0, %v1349
  %v1351 = vrot.slane %v1347, %v1350
  %v1352 = vmul.f32 %v1204, %v1351
  %v1353 = vmul.f32 %v1205, %v1351
  %v1354 = vmul.f32 %v1206, %v1351
  %v1355 = vmul.f32 %v1207, %v1351
  %v1356 = vld [vmem:[%s6] sm:$0x1]
  %v1358 = vlaneseq
  %v1359 = vshrl.u32 %v1358, 7
  %v1360 = vsub.s32 0, %v1359
  %v1361 = vrot.slane %v1356, %v1360
  %v1363 = vadd.f32 %v1352, %v1361
  %v1364 = vadd.f32 %v1353, %v1361
  %v1365 = vadd.f32 %v1354, %v1361
  %v1366 = vadd.f32 %v1355, %v1361
  %v1367 = vmax.f32 %v1363, 0.0
  %v1368 = vmax.f32 %v1364, 0.0
  %v1369 = vmax.f32 %v1365, 0.0
  %v1370 = vmax.f32 %v1366, 0.0
  %1371 = vst [vmem:[%s7] sm:$0xff] %v1367
  %1372 = vst [vmem:[%s7 + $0x8] sm:$0xff] %v1368
  %1373 = vst [vmem:[%s7 + $0x10] sm:$0xff] %v1369
  %1374 = vst [vmem:[%s7 + $0x18] sm:$0xff] %v1370
  // Predicated region
  $region30: #{double_conv_forward.1} parent=0 // pred_check
    _
  $region31: #{double_conv_forward.1} parent=0 // pred_check_branch
    %1376 = sbr.rel (0) target = $region33
  $region32: #{double_conv_forward.1} parent=0 // pred_region
    _
  $region33: #{double_conv_forward.1} parent=0 // pred_fallthru
    _
  // Predicated region
  $region34: #{double_conv_forward.1} parent=0 // pred_check
    _
  $region35: #{double_conv_forward.1} parent=0 // pred_check_branch
    %1378 = sbr.rel (0) target = $region37
  $region36: #{double_conv_forward.1} parent=0 // pred_region
    _
  $region37: #{double_conv_forward.1} parent=0 // pred_fallthru
    _

</llo_original>
